<compile_context>
chip_gen: v7x
topology: tpu7x:2x2x1
jax: 0.10.0
libtpu: 0.0.40
codegen_flags: <defaults>
</compile_context>

<pallas_src>
import functools

import jax
import jax.numpy as jnp
from jax import lax
from jax.experimental import pallas as pl
from jax.experimental.pallas import tpu as pltpu


def se_bottleneck_kernel(x_ref, w1_ref, b1_ref, w2_ref, b2_ref,
                         w3_ref, b3_ref, wfc1_ref, wfc2_ref,
                         out_ref, pad_ref, *, H, W):
    HW, Cin = x_ref.shape
    width = w1_ref.shape[1]
    Cout = w3_ref.shape[1]

    x = x_ref[...].astype(jnp.float32)                         # (HW, Cin)

    # --- conv1 (1x1, BN1 scale pre-folded) + bias + relu ---------------------
    h = jnp.dot(x.astype(jnp.bfloat16), w1_ref[...],
                preferred_element_type=jnp.float32)
    h = jnp.maximum(h + b1_ref[...], 0.0)                      # (HW, width) f32

    # --- conv2 (3x3, stride 1, pad 1) as ONE im2col matmul -------------------
    # Zero only the 1-px border of the padded scratch (interior is fully
    # overwritten each grid step, so this is also safe under "parallel").
    zr = jnp.zeros((1, W + 2, width), jnp.float32)
    zc = jnp.zeros((H + 2, 1, width), jnp.float32)
    pad_ref[0:1, :, :] = zr
    pad_ref[H + 1:H + 2, :, :] = zr
    pad_ref[:, 0:1, :] = zc
    pad_ref[:, W + 1:W + 2, :] = zc
    pad_ref[1:H + 1, 1:W + 1, :] = h.reshape(H, W, width)

    # Gather the 9 shifted windows and concatenate along channels -> K = 9*width,
    # then a single MXU matmul (no serial 9-tap VPU accumulate chain).
    patches = jnp.concatenate(
        [pad_ref[dy:dy + H, dx:dx + W, :].reshape(HW, width)
         for dy in range(3) for dx in range(3)],
        axis=-1)                                               # (HW, 9*width)
    h = jnp.dot(patches.astype(jnp.bfloat16), w2_ref[...],
                preferred_element_type=jnp.float32)
    h = jnp.maximum(h + b2_ref[...], 0.0)                      # (HW, width)

    # --- conv3 (1x1, BN3 scale pre-folded) + bias -----------------------------
    h3 = jnp.dot(h.astype(jnp.bfloat16), w3_ref[...],
                 preferred_element_type=jnp.float32)
    h3 = h3 + b3_ref[...]                                      # (HW, Cout)

    # --- SE: squeeze -> fc -> relu -> fc -> sigmoid (tiny, kept in f32) -------
    y = jnp.mean(h3, axis=0, keepdims=True)                    # (1, Cout)
    y = jnp.maximum(jnp.dot(y, wfc1_ref[...],
                            preferred_element_type=jnp.float32), 0.0)
    y = jnp.dot(y, wfc2_ref[...], preferred_element_type=jnp.float32)
    gate = jax.nn.sigmoid(y)                                   # (1, Cout)

    # --- scale + residual add + relu (Cin == Cout for this block config) ------
    out_ref[...] = jnp.maximum(h3 * gate + x, 0.0).astype(out_ref.dtype)


def se_bottleneck_pallas(x_nhwc, params):
    (w1, s1, b1, w2, s2, b2, w3, s3, b3, wfc1, wfc2) = params
    N, H, W, Cin = x_nhwc.shape
    width = w1.shape[1]
    Cout = w3.shape[1]
    Csq = wfc1.shape[1]
    HW = H * W

    # Fold BN scales into the conv weights (one-time) and cast MXU operands to
    # bf16; biases and the tiny SE FC weights stay f32.
    w1f = (w1 * s1[None, :]).astype(jnp.bfloat16)
    w2f = (w2 * s2[None, None, None, :]).reshape(9 * width, width).astype(jnp.bfloat16)
    w3f = (w3 * s3[None, :]).astype(jnp.bfloat16)
    b1r = b1.reshape(1, -1).astype(jnp.float32)
    b2r = b2.reshape(1, -1).astype(jnp.float32)
    b3r = b3.reshape(1, -1).astype(jnp.float32)

    # Channel-last, spatially flattened activations (NHWC kept end-to-end).
    x3 = x_nhwc.reshape(N, HW, Cin)

    kernel = functools.partial(se_bottleneck_kernel, H=H, W=W)

    flops = (2 * N * HW * (Cin * width + 9 * width * width + width * Cout)
             + 4 * N * Cout * Csq)
    bytes_accessed = (N * HW * Cin * 4 + N * HW * Cout * 4
                      + (w1f.size + w2f.size + w3f.size) * 2
                      + (wfc1.size + wfc2.size) * 4
                      + (b1r.size + b2r.size + b3r.size) * 4)

    out3 = pl.pallas_call(
        kernel,
        out_shape=jax.ShapeDtypeStruct((N, HW, Cout), x_nhwc.dtype),
        grid=(N,),
        in_specs=[
            pl.BlockSpec((None, HW, Cin), lambda n: (n, 0, 0)),
            pl.BlockSpec((Cin, width), lambda n: (0, 0)),
            pl.BlockSpec((1, width), lambda n: (0, 0)),
            pl.BlockSpec((9 * width, width), lambda n: (0, 0)),
            pl.BlockSpec((1, width), lambda n: (0, 0)),
            pl.BlockSpec((width, Cout), lambda n: (0, 0)),
            pl.BlockSpec((1, Cout), lambda n: (0, 0)),
            pl.BlockSpec((Cout, Csq), lambda n: (0, 0)),
            pl.BlockSpec((Csq, Cout), lambda n: (0, 0)),
        ],
        out_specs=pl.BlockSpec((None, HW, Cout), lambda n: (n, 0, 0)),
        scratch_shapes=[pltpu.VMEM((H + 2, W + 2, width), jnp.float32)],
        compiler_params=pltpu.CompilerParams(
            dimension_semantics=("parallel",)),
        cost_estimate=pl.CostEstimate(
            flops=int(flops),
            transcendentals=int(N * Cout),
            bytes_accessed=int(bytes_accessed)),
    )(x3, w1f, b1r, w2f, b2r, w3f, b3r, wfc1, wfc2)

    # TODO(synk): at 56x56-class activations, tile the HW axis with a 1-row halo
    # and budget against v7x's 64 MiB VMEM instead of keeping a full sample resident.
    return out3.reshape(N, H, W, Cout)


def se_bottleneck_ref(x_nhwc, params):
    """Pure-JAX f32 reference (same NHWC layout) used for correctness checking."""
    (w1, s1, b1, w2, s2, b2, w3, s3, b3, wfc1, wfc2) = params
    h = jnp.einsum('nhwc,co->nhwo', x_nhwc, w1) * s1 + b1
    h = jax.nn.relu(h)
    h = lax.conv_general_dilated(h, w2, window_strides=(1, 1),
                                 padding=((1, 1), (1, 1)),
                                 dimension_numbers=('NHWC', 'HWIO', 'NHWC'))
    h = jax.nn.relu(h * s2 + b2)
    h = jnp.einsum('nhwc,co->nhwo', h, w3) * s3 + b3
    y = jnp.mean(h, axis=(1, 2))
    y = jax.nn.relu(y @ wfc1) @ wfc2
    y = jax.nn.sigmoid(y)
    h = h * y[:, None, None, :]
    return jax.nn.relu(h + x_nhwc)


def make_params(key, inplanes, planes, base_width=64, groups=1, r=16,
                expansion=4, eps=1e-5):
    width = int(planes * (base_width / 64.0)) * groups
    cout = planes * expansion
    ks = jax.random.split(key, 16)

    def bn(kg, kb, km, kv, c):
        gamma = jax.random.uniform(kg, (c,), jnp.float32, 0.5, 1.5)
        beta = jax.random.uniform(kb, (c,), jnp.float32, -0.5, 0.5)
        mean = jax.random.uniform(km, (c,), jnp.float32, -0.1, 0.1)
        var = jax.random.uniform(kv, (c,), jnp.float32, 0.5, 1.5)
        scale = gamma / jnp.sqrt(var + eps)
        bias = beta - mean * scale
        return scale, bias

    # conv weights stored in matmul-ready form:
    #   conv1x1: (Cin, Cout) ; conv3x3: HWIO (3, 3, Cin, Cout)
    w1 = jax.random.normal(ks[0], (inplanes, width), jnp.float32) * 0.1
    w2 = jax.random.normal(ks[1], (3, 3, width, width), jnp.float32) * 0.1
    w3 = jax.random.normal(ks[2], (width, cout), jnp.float32) * 0.1
    s1, b1 = bn(ks[3], ks[4], ks[5], ks[6], width)
    s2, b2 = bn(ks[7], ks[8], ks[9], ks[10], width)
    s3, b3 = bn(ks[11], ks[12], ks[13], ks[14], cout)
    kf1, kf2 = jax.random.split(ks[15])
    wfc1 = jax.random.normal(kf1, (cout, cout // r), jnp.float32) * 0.1
    wfc2 = jax.random.normal(kf2, (cout // r, cout), jnp.float32) * 0.1
    return (w1, s1, b1, w2, s2, b2, w3, s3, b3, wfc1, wfc2)


if __name__ == "__main__":
    # SEBottleneck(inplanes=64, planes=16): width=16, out channels=64, stride=1,
    # no downsample (identity add requires inplanes == planes*4 -> satisfied).
    N, Cin, H, W = 2, 64, 8, 8
    planes = 16

    key = jax.random.PRNGKey(0)
    kx, kp = jax.random.split(key)
    x_nchw = jax.random.normal(kx, (N, Cin, H, W), jnp.float32)
    params = make_params(kp, inplanes=Cin, planes=planes)

    # NCHW (PyTorch convention) -> NHWC once at the boundary; inside a model the
    # NHWC layout would be kept between layers so this cost is paid zero times.
    x_nhwc = jnp.transpose(x_nchw, (0, 2, 3, 1))

    out_nhwc = se_bottleneck_pallas(x_nhwc, params)
    out_nhwc = jax.block_until_ready(out_nhwc)
    out_nchw = jnp.transpose(out_nhwc, (0, 3, 1, 2))

    ref_nhwc = se_bottleneck_ref(x_nhwc, params)
    assert out_nchw.shape == (N, planes * 4, H, W)
    # bf16 matmul operands (f32 accumulation) -> relaxed tolerance vs f32 reference.
    assert jnp.allclose(out_nhwc, ref_nhwc, atol=5e-2, rtol=5e-2), (
        float(jnp.max(jnp.abs(out_nhwc - ref_nhwc))))

    print("KERNEL_OK")
</pallas_src>

<mosaic_0001>
module attributes {stable_mosaic.version = 11 : i64} {
  func.func @se_bottleneck_kernel(%arg0: i32, %arg1: memref<1x64x64xf32, #tpu.memory_space<vmem>>, %arg2: memref<64x16xbf16, #tpu.memory_space<vmem>>, %arg3: memref<1x16xf32, #tpu.memory_space<vmem>>, %arg4: memref<144x16xbf16, #tpu.memory_space<vmem>>, %arg5: memref<1x16xf32, #tpu.memory_space<vmem>>, %arg6: memref<16x64xbf16, #tpu.memory_space<vmem>>, %arg7: memref<1x64xf32, #tpu.memory_space<vmem>>, %arg8: memref<64x4xf32, #tpu.memory_space<vmem>>, %arg9: memref<4x64xf32, #tpu.memory_space<vmem>>, %arg10: memref<1x64x64xf32, #tpu.memory_space<vmem>>, %arg11: memref<10x10x16xf32, #tpu.memory_space<vmem>>) attributes {dimension_semantics = [#tpu.dimension_semantics<parallel>], iteration_bounds = array<i64: 2>, scalar_prefetch = 0 : i64, scratch_operands = 1 : i64, tpu.core_type = #tpu.core_type<tc>, window_params = [{transform_indices = @transform_0, window_bounds = array<i64: 1, 64, 64>}, {pipeline_mode = #tpu.pipeline_mode<synchronous>, transform_indices = @transform_1, window_bounds = array<i64: 64, 16>}, {pipeline_mode = #tpu.pipeline_mode<synchronous>, transform_indices = @transform_2, window_bounds = array<i64: 1, 16>}, {pipeline_mode = #tpu.pipeline_mode<synchronous>, transform_indices = @transform_3, window_bounds = array<i64: 144, 16>}, {pipeline_mode = #tpu.pipeline_mode<synchronous>, transform_indices = @transform_4, window_bounds = array<i64: 1, 16>}, {pipeline_mode = #tpu.pipeline_mode<synchronous>, transform_indices = @transform_5, window_bounds = array<i64: 16, 64>}, {pipeline_mode = #tpu.pipeline_mode<synchronous>, transform_indices = @transform_6, window_bounds = array<i64: 1, 64>}, {pipeline_mode = #tpu.pipeline_mode<synchronous>, transform_indices = @transform_7, window_bounds = array<i64: 64, 4>}, {pipeline_mode = #tpu.pipeline_mode<synchronous>, transform_indices = @transform_8, window_bounds = array<i64: 4, 64>}, {transform_indices = @transform_9, window_bounds = array<i64: 1, 64, 64>}]} {
    %c0 = arith.constant 0 : index
    %c0_0 = arith.constant 0 : index
    %c0_1 = arith.constant 0 : index
    %0 = vector.load %arg1[%c0, %c0_0, %c0_1] : memref<1x64x64xf32, #tpu.memory_space<vmem>>, vector<1x64x64xf32>
    %1 = vector.shape_cast %0 : vector<1x64x64xf32> to vector<64x64xf32>
    %2 = arith.truncf %1 : vector<64x64xf32> to vector<64x64xbf16>
    %c0_2 = arith.constant 0 : index
    %c0_3 = arith.constant 0 : index
    %3 = vector.load %arg2[%c0_2, %c0_3] : memref<64x16xbf16, #tpu.memory_space<vmem>>, vector<64x16xbf16>
    %cst = arith.constant dense<0.000000e+00> : vector<64x16xf32>
    %4 = tpu.matmul %2, %3, %cst {dimension_numbers = #tpu.dot_dimension_numbers<[1], [0], [0], [1], [0, 0, 1, 1], [], []>} : vector<64x64xbf16>, vector<64x16xbf16>, vector<64x16xf32> -> vector<64x16xf32>
    %c0_4 = arith.constant 0 : index
    %c0_5 = arith.constant 0 : index
    %5 = vector.load %arg3[%c0_4, %c0_5] : memref<1x16xf32, #tpu.memory_space<vmem>>, vector<1x16xf32>
    %6 = vector.broadcast %5 : vector<1x16xf32> to vector<64x16xf32>
    %7 = arith.addf %4, %6 : vector<64x16xf32>
    %cst_6 = arith.constant 0.000000e+00 : f32
    %8 = vector.broadcast %cst_6 : f32 to vector<64x16xf32>
    %9 = arith.maximumf %7, %8 : vector<64x16xf32>
    %cst_7 = arith.constant 0.000000e+00 : f32
    %10 = vector.broadcast %cst_7 : f32 to vector<1x10x16xf32>
    %cst_8 = arith.constant 0.000000e+00 : f32
    %11 = vector.broadcast %cst_8 : f32 to vector<10x1x16xf32>
    %c0_9 = arith.constant 0 : index
    %c0_10 = arith.constant 0 : index
    %c0_11 = arith.constant 0 : index
    %12 = vector.load %arg11[%c0_9, %c0_10, %c0_11] : memref<10x10x16xf32, #tpu.memory_space<vmem>>, vector<1x10x16xf32>
    tpu.vector_store %arg11[%c0_9, %c0_10, %c0_11], %10 {strides = array<i32>} : memref<10x10x16xf32, #tpu.memory_space<vmem>>, vector<1x10x16xf32>,
    %c9 = arith.constant 9 : index
    %c0_12 = arith.constant 0 : index
    %c0_13 = arith.constant 0 : index
    %13 = vector.load %arg11[%c9, %c0_12, %c0_13] : memref<10x10x16xf32, #tpu.memory_space<vmem>>, vector<1x10x16xf32>
    tpu.vector_store %arg11[%c9, %c0_12, %c0_13], %10 {strides = array<i32>} : memref<10x10x16xf32, #tpu.memory_space<vmem>>, vector<1x10x16xf32>,
    %c0_14 = arith.constant 0 : index
    %c0_15 = arith.constant 0 : index
    %c0_16 = arith.constant 0 : index
    %14 = vector.load %arg11[%c0_14, %c0_15, %c0_16] : memref<10x10x16xf32, #tpu.memory_space<vmem>>, vector<10x1x16xf32>
    tpu.vector_store %arg11[%c0_14, %c0_15, %c0_16], %11 {strides = array<i32>} : memref<10x10x16xf32, #tpu.memory_space<vmem>>, vector<10x1x16xf32>,
    %c0_17 = arith.constant 0 : index
    %c9_18 = arith.constant 9 : index
    %c0_19 = arith.constant 0 : index
    %15 = vector.load %arg11[%c0_17, %c9_18, %c0_19] : memref<10x10x16xf32, #tpu.memory_space<vmem>>, vector<10x1x16xf32>
    tpu.vector_store %arg11[%c0_17, %c9_18, %c0_19], %11 {strides = array<i32>} : memref<10x10x16xf32, #tpu.memory_space<vmem>>, vector<10x1x16xf32>,
    %16 = vector.shape_cast %9 : vector<64x16xf32> to vector<8x8x16xf32>
    %c1 = arith.constant 1 : index
    %c1_20 = arith.constant 1 : index
    %c0_21 = arith.constant 0 : index
    %17 = vector.load %arg11[%c1, %c1_20, %c0_21] : memref<10x10x16xf32, #tpu.memory_space<vmem>>, vector<8x8x16xf32>
    tpu.vector_store %arg11[%c1, %c1_20, %c0_21], %16 {strides = array<i32>} : memref<10x10x16xf32, #tpu.memory_space<vmem>>, vector<8x8x16xf32>,
    %c0_22 = arith.constant 0 : index
    %c0_23 = arith.constant 0 : index
    %c0_24 = arith.constant 0 : index
    %18 = vector.load %arg11[%c0_22, %c0_23, %c0_24] : memref<10x10x16xf32, #tpu.memory_space<vmem>>, vector<8x8x16xf32>
    %19 = vector.shape_cast %18 : vector<8x8x16xf32> to vector<64x16xf32>
    %c0_25 = arith.constant 0 : index
    %c1_26 = arith.constant 1 : index
    %c0_27 = arith.constant 0 : index
    %20 = vector.load %arg11[%c0_25, %c1_26, %c0_27] : memref<10x10x16xf32, #tpu.memory_space<vmem>>, vector<8x8x16xf32>
    %21 = vector.shape_cast %20 : vector<8x8x16xf32> to vector<64x16xf32>
    %c0_28 = arith.constant 0 : index
    %c2 = arith.constant 2 : index
    %c0_29 = arith.constant 0 : index
    %22 = vector.load %arg11[%c0_28, %c2, %c0_29] : memref<10x10x16xf32, #tpu.memory_space<vmem>>, vector<8x8x16xf32>
    %23 = vector.shape_cast %22 : vector<8x8x16xf32> to vector<64x16xf32>
    %c1_30 = arith.constant 1 : index
    %c0_31 = arith.constant 0 : index
    %c0_32 = arith.constant 0 : index
    %24 = vector.load %arg11[%c1_30, %c0_31, %c0_32] : memref<10x10x16xf32, #tpu.memory_space<vmem>>, vector<8x8x16xf32>
    %25 = vector.shape_cast %24 : vector<8x8x16xf32> to vector<64x16xf32>
    %c1_33 = arith.constant 1 : index
    %c1_34 = arith.constant 1 : index
    %c0_35 = arith.constant 0 : index
    %26 = vector.load %arg11[%c1_33, %c1_34, %c0_35] : memref<10x10x16xf32, #tpu.memory_space<vmem>>, vector<8x8x16xf32>
    %27 = vector.shape_cast %26 : vector<8x8x16xf32> to vector<64x16xf32>
    %c1_36 = arith.constant 1 : index
    %c2_37 = arith.constant 2 : index
    %c0_38 = arith.constant 0 : index
    %28 = vector.load %arg11[%c1_36, %c2_37, %c0_38] : memref<10x10x16xf32, #tpu.memory_space<vmem>>, vector<8x8x16xf32>
    %29 = vector.shape_cast %28 : vector<8x8x16xf32> to vector<64x16xf32>
    %c2_39 = arith.constant 2 : index
    %c0_40 = arith.constant 0 : index
    %c0_41 = arith.constant 0 : index
    %30 = vector.load %arg11[%c2_39, %c0_40, %c0_41] : memref<10x10x16xf32, #tpu.memory_space<vmem>>, vector<8x8x16xf32>
    %31 = vector.shape_cast %30 : vector<8x8x16xf32> to vector<64x16xf32>
    %c2_42 = arith.constant 2 : index
    %c1_43 = arith.constant 1 : index
    %c0_44 = arith.constant 0 : index
    %32 = vector.load %arg11[%c2_42, %c1_43, %c0_44] : memref<10x10x16xf32, #tpu.memory_space<vmem>>, vector<8x8x16xf32>
    %33 = vector.shape_cast %32 : vector<8x8x16xf32> to vector<64x16xf32>
    %c2_45 = arith.constant 2 : index
    %c2_46 = arith.constant 2 : index
    %c0_47 = arith.constant 0 : index
    %34 = vector.load %arg11[%c2_45, %c2_46, %c0_47] : memref<10x10x16xf32, #tpu.memory_space<vmem>>, vector<8x8x16xf32>
    %35 = vector.shape_cast %34 : vector<8x8x16xf32> to vector<64x16xf32>
    %36 = tpu.concatenate %19, %21, %23, %25, %27, %29, %31, %33, %35 in 1 : vector<64x16xf32>, vector<64x16xf32>, vector<64x16xf32>, vector<64x16xf32>, vector<64x16xf32>, vector<64x16xf32>, vector<64x16xf32>, vector<64x16xf32>, vector<64x16xf32> -> vector<64x144xf32>
    %37 = arith.truncf %36 : vector<64x144xf32> to vector<64x144xbf16>
    %c0_48 = arith.constant 0 : index
    %c0_49 = arith.constant 0 : index
    %38 = vector.load %arg4[%c0_48, %c0_49] : memref<144x16xbf16, #tpu.memory_space<vmem>>, vector<144x16xbf16>
    %cst_50 = arith.constant dense<0.000000e+00> : vector<64x16xf32>
    %39 = tpu.matmul %37, %38, %cst_50 {dimension_numbers = #tpu.dot_dimension_numbers<[1], [0], [0], [1], [0, 0, 1, 1], [], []>} : vector<64x144xbf16>, vector<144x16xbf16>, vector<64x16xf32> -> vector<64x16xf32>
    %c0_51 = arith.constant 0 : index
    %c0_52 = arith.constant 0 : index
    %40 = vector.load %arg5[%c0_51, %c0_52] : memref<1x16xf32, #tpu.memory_space<vmem>>, vector<1x16xf32>
    %41 = vector.broadcast %40 : vector<1x16xf32> to vector<64x16xf32>
    %42 = arith.addf %39, %41 : vector<64x16xf32>
    %cst_53 = arith.constant 0.000000e+00 : f32
    %43 = vector.broadcast %cst_53 : f32 to vector<64x16xf32>
    %44 = arith.maximumf %42, %43 : vector<64x16xf32>
    %45 = arith.truncf %44 : vector<64x16xf32> to vector<64x16xbf16>
    %c0_54 = arith.constant 0 : index
    %c0_55 = arith.constant 0 : index
    %46 = vector.load %arg6[%c0_54, %c0_55] : memref<16x64xbf16, #tpu.memory_space<vmem>>, vector<16x64xbf16>
    %cst_56 = arith.constant dense<0.000000e+00> : vector<64x64xf32>
    %47 = tpu.matmul %45, %46, %cst_56 {dimension_numbers = #tpu.dot_dimension_numbers<[1], [0], [0], [1], [0, 0, 1, 1], [], []>} : vector<64x16xbf16>, vector<16x64xbf16>, vector<64x64xf32> -> vector<64x64xf32>
    %c0_57 = arith.constant 0 : index
    %c0_58 = arith.constant 0 : index
    %48 = vector.load %arg7[%c0_57, %c0_58] : memref<1x64xf32, #tpu.memory_space<vmem>>, vector<1x64xf32>
    %49 = vector.broadcast %48 : vector<1x64xf32> to vector<64x64xf32>
    %50 = arith.addf %47, %49 : vector<64x64xf32>
    %cst_59 = arith.constant dense<0.000000e+00> : vector<64xf32>
    %51 = vector.multi_reduction <add>, %50, %cst_59 [0] : vector<64x64xf32> to vector<64xf32>
    %52 = vector.shape_cast %51 : vector<64xf32> to vector<1x64xf32>
    %cst_60 = arith.constant 6.400000e+01 : f32
    %53 = vector.broadcast %cst_60 : f32 to vector<1x64xf32>
    %54 = arith.divf %52, %53 : vector<1x64xf32>
    %c0_61 = arith.constant 0 : index
    %c0_62 = arith.constant 0 : index
    %55 = vector.load %arg8[%c0_61, %c0_62] : memref<64x4xf32, #tpu.memory_space<vmem>>, vector<64x4xf32>
    %cst_63 = arith.constant dense<0.000000e+00> : vector<1x4xf32>
    %56 = tpu.matmul %54, %55, %cst_63 {dimension_numbers = #tpu.dot_dimension_numbers<[1], [0], [0], [1], [0, 0, 1, 1], [], []>} : vector<1x64xf32>, vector<64x4xf32>, vector<1x4xf32> -> vector<1x4xf32>
    %cst_64 = arith.constant 0.000000e+00 : f32
    %57 = vector.broadcast %cst_64 : f32 to vector<1x4xf32>
    %58 = arith.maximumf %56, %57 : vector<1x4xf32>
    %c0_65 = arith.constant 0 : index
    %c0_66 = arith.constant 0 : index
    %59 = vector.load %arg9[%c0_65, %c0_66] : memref<4x64xf32, #tpu.memory_space<vmem>>, vector<4x64xf32>
    %cst_67 = arith.constant dense<0.000000e+00> : vector<1x64xf32>
    %60 = tpu.matmul %58, %59, %cst_67 {dimension_numbers = #tpu.dot_dimension_numbers<[1], [0], [0], [1], [0, 0, 1, 1], [], []>} : vector<1x4xf32>, vector<4x64xf32>, vector<1x64xf32> -> vector<1x64xf32>
    %61 = arith.negf %60 : vector<1x64xf32>
    %62 = math.exp %61 : vector<1x64xf32>
    %cst_68 = arith.constant 1.000000e+00 : f32
    %63 = vector.broadcast %cst_68 : f32 to vector<1x64xf32>
    %64 = arith.addf %63, %62 : vector<1x64xf32>
    %65 = arith.divf %63, %64 : vector<1x64xf32>
    %66 = vector.broadcast %65 : vector<1x64xf32> to vector<64x64xf32>
    %67 = arith.mulf %50, %66 : vector<64x64xf32>
    %68 = arith.addf %67, %1 : vector<64x64xf32>
    %cst_69 = arith.constant 0.000000e+00 : f32
    %69 = vector.broadcast %cst_69 : f32 to vector<64x64xf32>
    %70 = arith.maximumf %68, %69 : vector<64x64xf32>
    %c0_70 = arith.constant 0 : index
    %c0_71 = arith.constant 0 : index
    %c0_72 = arith.constant 0 : index
    %71 = vector.load %arg10[%c0_70, %c0_71, %c0_72] : memref<1x64x64xf32, #tpu.memory_space<vmem>>, vector<1x64x64xf32>
    %72 = vector.shape_cast %71 : vector<1x64x64xf32> to vector<64x64xf32>
    %73 = vector.shape_cast %70 : vector<64x64xf32> to vector<1x64x64xf32>
    tpu.vector_store %arg10[%c0_70, %c0_71, %c0_72], %73 {strides = array<i32>} : memref<1x64x64xf32, #tpu.memory_space<vmem>>, vector<1x64x64xf32>,
    return
  }
  func.func @transform_0(%arg0: i32) -> (i32, i32, i32) {
    %c0_i32 = arith.constant 0 : i32
    %c0_i32_0 = arith.constant 0 : i32
    %c0_i32_1 = arith.constant 0 : i32
    return %arg0, %c0_i32, %c0_i32_0 : i32, i32, i32
  }
  func.func @transform_1(%arg0: i32) -> (i32, i32) {
    %c0_i32 = arith.constant 0 : i32
    %c0_i32_0 = arith.constant 0 : i32
    %c0_i32_1 = arith.constant 0 : i32
    return %c0_i32, %c0_i32_0 : i32, i32
  }
  func.func @transform_2(%arg0: i32) -> (i32, i32) {
    %c0_i32 = arith.constant 0 : i32
    %c0_i32_0 = arith.constant 0 : i32
    %c0_i32_1 = arith.constant 0 : i32
    return %c0_i32, %c0_i32_0 : i32, i32
  }
  func.func @transform_3(%arg0: i32) -> (i32, i32) {
    %c0_i32 = arith.constant 0 : i32
    %c0_i32_0 = arith.constant 0 : i32
    %c0_i32_1 = arith.constant 0 : i32
    return %c0_i32, %c0_i32_0 : i32, i32
  }
  func.func @transform_4(%arg0: i32) -> (i32, i32) {
    %c0_i32 = arith.constant 0 : i32
    %c0_i32_0 = arith.constant 0 : i32
    %c0_i32_1 = arith.constant 0 : i32
    return %c0_i32, %c0_i32_0 : i32, i32
  }
  func.func @transform_5(%arg0: i32) -> (i32, i32) {
    %c0_i32 = arith.constant 0 : i32
    %c0_i32_0 = arith.constant 0 : i32
    %c0_i32_1 = arith.constant 0 : i32
    return %c0_i32, %c0_i32_0 : i32, i32
  }
  func.func @transform_6(%arg0: i32) -> (i32, i32) {
    %c0_i32 = arith.constant 0 : i32
    %c0_i32_0 = arith.constant 0 : i32
    %c0_i32_1 = arith.constant 0 : i32
    return %c0_i32, %c0_i32_0 : i32, i32
  }
  func.func @transform_7(%arg0: i32) -> (i32, i32) {
    %c0_i32 = arith.constant 0 : i32
    %c0_i32_0 = arith.constant 0 : i32
    %c0_i32_1 = arith.constant 0 : i32
    return %c0_i32, %c0_i32_0 : i32, i32
  }
  func.func @transform_8(%arg0: i32) -> (i32, i32) {
    %c0_i32 = arith.constant 0 : i32
    %c0_i32_0 = arith.constant 0 : i32
    %c0_i32_1 = arith.constant 0 : i32
    return %c0_i32, %c0_i32_0 : i32, i32
  }
  func.func @transform_9(%arg0: i32) -> (i32, i32, i32) {
    %c0_i32 = arith.constant 0 : i32
    %c0_i32_0 = arith.constant 0 : i32
    %c0_i32_1 = arith.constant 0 : i32
    return %arg0, %c0_i32, %c0_i32_0 : i32, i32, i32
  }
}

</mosaic_0001>

<llo_original>
// kernel: tpu_custom_call.1
$region0: #{tpu_custom_call.1}
  #allocation0 [shape = 'u32[]', space=smem, size = 0x4, offset = 0x4, fixed_abs, tag = 'smem constant byte address 0x4 - core index']
  #allocation1 [shape = 'u32[144,128]{1,0:T(1,128)}', space=vmem, size = 0x12000, scoped, tag = 'internal scratch']
  #allocation2 [shape = 'f32[10,10,16]{2,1,0:T(8,128)}', space=vmem, size = 0x14000, scoped, tag = 'scratch operand']
  %s0 = inlined_call_operand.vmem [shape: f32[2,64,64], index: 0, kind: input, shape index: {}]
  %s1 = inlined_call_operand.vmem [shape: bf16[64,16], index: 1, kind: input, shape index: {}]
  %s2 = inlined_call_operand.vmem [shape: f32[1,16], index: 2, kind: input, shape index: {}]
  %s3 = inlined_call_operand.vmem [shape: bf16[144,16], index: 3, kind: input, shape index: {}]
  %s4 = inlined_call_operand.vmem [shape: f32[1,16], index: 4, kind: input, shape index: {}]
  %s5 = inlined_call_operand.vmem [shape: bf16[16,64], index: 5, kind: input, shape index: {}]
  %s6 = inlined_call_operand.vmem [shape: f32[1,64], index: 6, kind: input, shape index: {}]
  %s7 = inlined_call_operand.vmem [shape: f32[64,4], index: 7, kind: input, shape index: {}]
  %s8 = inlined_call_operand.vmem [shape: f32[4,64], index: 8, kind: input, shape index: {}]
  %s9 = inlined_call_operand.hbm [shape: f32[2,64,64], index: 9, kind: output, shape index: {}]
  %s10 = sld [smem:[#allocation0]]
  $region69: #{tpu_custom_call.1} parent=0
    _
  %s12 = ssub.s32 1, %s10
  %s13 = scalar_select 0, %s12, %s10
  $region1: #{tpu_custom_call.1} parent=0
    #allocation3 [shape = 'u8[65536]{0}', space=vmem, size = 0x10000, scoped, tag = 'output window, operand 0']
    #allocation4 [shape = 's32[2]{0}', space=sflag, size = 0x8, scoped, tag = 'scoped memory for tpu_custom_call.1']
    %14 = vsyncpa [#allocation4], 0
    %s15 = scalar_lea.sflag [#allocation4], 1
    %16 = vsyncpa %s15, 0
    loop: start=0, step=1, limit=4
    $region2: #{tpu_custom_call.1} parent=1 // loop_pre_header
      _
    $region3: #{tpu_custom_call.1} parent=1 // loop_header
      %s18 = sphi 0, %s22
      %p19 = scmp.ge.s32.totalorder %s18, 4
      %s28 = sphi 0, %s30
      %s31 = sphi 0, %s28
      %s32 = sphi 0, %s31
      %s48 = sphi 0, %s32
      %s52 = sphi 0, %s52
      %s54 = sphi 0, %s52
      %s55 = sphi 0, %s54
      %s69 = sphi 0, %s55
      %s73 = sphi 0, %s73
      %s75 = sphi 0, %s73
      %s76 = sphi 0, %s75
      %s90 = sphi 0, %s76
      %s94 = sphi 0, %s94
      %s96 = sphi 0, %s94
      %s97 = sphi 0, %s96
      %s111 = sphi 0, %s97
      %s115 = sphi 0, %s115
      %s117 = sphi 0, %s115
      %s118 = sphi 0, %s117
      %s132 = sphi 0, %s118
      %s136 = sphi 0, %s136
      %s138 = sphi 0, %s136
      %s139 = sphi 0, %s138
      %s153 = sphi 0, %s139
      %s157 = sphi 0, %s157
      %s159 = sphi 0, %s157
      %s160 = sphi 0, %s159
      %s174 = sphi 0, %s160
      %s178 = sphi 0, %s178
      %s180 = sphi 0, %s178
      %s181 = sphi 0, %s180
      %s195 = sphi 0, %s181
      %s199 = sphi 0, %s199
      %s201 = sphi 0, %s199
      %s202 = sphi 0, %s201
      %s216 = sphi 0, %s202
      %s222 = sphi 0, %s224
      %s225 = sphi 0, %s222
      %s226 = sphi 0, %s225
      %s242 = sphi 0, %s226
    $region4: #{tpu_custom_call.1} parent=1 // loop_header_branch
      %21 = sbr.rel (%p19) target = $region8
    $region5: #{tpu_custom_call.1} parent=1 // loop_body
      %s23 = ssub.s32 %s18, 1
      %s24 = ssub.s32 %s18, 2
      %s25 = sadd.s32 %s18, 1
      %s26 = ssub.s32 %s18, %s25
      %p27 = scmp.eq.s32.totalorder %s26, 0
      %s29 = sadd.s32 %s28, 1
      %s30 = scalar_select %p27, %s28, %s29
      %p33 = pneg %p27
      %p34 = scmp.eq.s32.totalorder %s18, 1
      %p35 = por %p33, %p34
      %p36 = scmp.ne.s32.totalorder %s28, %s31
      %p37 = scmp.eq.s32.totalorder %s18, 0
      %p38 = por %p36, %p37
      %p39 = scmp.ne.s32.totalorder %s28, %s31
      %p40 = scmp.eq.s32.totalorder %s23, 1
      %p41 = por %p39, %p40
      %p42 = scmp.ne.s32.totalorder %s31, %s32
      %p43 = scmp.eq.s32.totalorder %s23, 0
      %p44 = por %p42, %p43
      %p45 = scmp.ne.s32.totalorder %s31, %s32
      %p46 = scmp.eq.s32.totalorder %s24, 1
      %p47 = por %p45, %p46
      %p49 = scmp.ne.s32.totalorder %s32, %s48
      %p50 = scmp.eq.s32.totalorder %s24, 0
      %p51 = por %p49, %p50
      %s53 = sadd.s32 %s52, 1
      %p56 = scmp.eq.s32.totalorder %s18, 1
      %p57 = scmp.ne.s32.totalorder %s52, %s54
      %p58 = scmp.eq.s32.totalorder %s18, 0
      %p59 = por %p57, %p58
      %p60 = scmp.ne.s32.totalorder %s52, %s54
      %p61 = scmp.eq.s32.totalorder %s23, 1
      %p62 = por %p60, %p61
      %p63 = scmp.ne.s32.totalorder %s54, %s55
      %p64 = scmp.eq.s32.totalorder %s23, 0
      %p65 = por %p63, %p64
      %p66 = scmp.ne.s32.totalorder %s54, %s55
      %p67 = scmp.eq.s32.totalorder %s24, 1
      %p68 = por %p66, %p67
      %p70 = scmp.ne.s32.totalorder %s55, %s69
      %p71 = scmp.eq.s32.totalorder %s24, 0
      %p72 = por %p70, %p71
      %s74 = sadd.s32 %s73, 1
      %p77 = scmp.eq.s32.totalorder %s18, 1
      %p78 = scmp.ne.s32.totalorder %s73, %s75
      %p79 = scmp.eq.s32.totalorder %s18, 0
      %p80 = por %p78, %p79
      %p81 = scmp.ne.s32.totalorder %s73, %s75
      %p82 = scmp.eq.s32.totalorder %s23, 1
      %p83 = por %p81, %p82
      %p84 = scmp.ne.s32.totalorder %s75, %s76
      %p85 = scmp.eq.s32.totalorder %s23, 0
      %p86 = por %p84, %p85
      %p87 = scmp.ne.s32.totalorder %s75, %s76
      %p88 = scmp.eq.s32.totalorder %s24, 1
      %p89 = por %p87, %p88
      %p91 = scmp.ne.s32.totalorder %s76, %s90
      %p92 = scmp.eq.s32.totalorder %s24, 0
      %p93 = por %p91, %p92
      %s95 = sadd.s32 %s94, 1
      %p98 = scmp.eq.s32.totalorder %s18, 1
      %p99 = scmp.ne.s32.totalorder %s94, %s96
      %p100 = scmp.eq.s32.totalorder %s18, 0
      %p101 = por %p99, %p100
      %p102 = scmp.ne.s32.totalorder %s94, %s96
      %p103 = scmp.eq.s32.totalorder %s23, 1
      %p104 = por %p102, %p103
      %p105 = scmp.ne.s32.totalorder %s96, %s97
      %p106 = scmp.eq.s32.totalorder %s23, 0
      %p107 = por %p105, %p106
      %p108 = scmp.ne.s32.totalorder %s96, %s97
      %p109 = scmp.eq.s32.totalorder %s24, 1
      %p110 = por %p108, %p109
      %p112 = scmp.ne.s32.totalorder %s97, %s111
      %p113 = scmp.eq.s32.totalorder %s24, 0
      %p114 = por %p112, %p113
      %s116 = sadd.s32 %s115, 1
      %p119 = scmp.eq.s32.totalorder %s18, 1
      %p120 = scmp.ne.s32.totalorder %s115, %s117
      %p121 = scmp.eq.s32.totalorder %s18, 0
      %p122 = por %p120, %p121
      %p123 = scmp.ne.s32.totalorder %s115, %s117
      %p124 = scmp.eq.s32.totalorder %s23, 1
      %p125 = por %p123, %p124
      %p126 = scmp.ne.s32.totalorder %s117, %s118
      %p127 = scmp.eq.s32.totalorder %s23, 0
      %p128 = por %p126, %p127
      %p129 = scmp.ne.s32.totalorder %s117, %s118
      %p130 = scmp.eq.s32.totalorder %s24, 1
      %p131 = por %p129, %p130
      %p133 = scmp.ne.s32.totalorder %s118, %s132
      %p134 = scmp.eq.s32.totalorder %s24, 0
      %p135 = por %p133, %p134
      %s137 = sadd.s32 %s136, 1
      %p140 = scmp.eq.s32.totalorder %s18, 1
      %p141 = scmp.ne.s32.totalorder %s136, %s138
      %p142 = scmp.eq.s32.totalorder %s18, 0
      %p143 = por %p141, %p142
      %p144 = scmp.ne.s32.totalorder %s136, %s138
      %p145 = scmp.eq.s32.totalorder %s23, 1
      %p146 = por %p144, %p145
      %p147 = scmp.ne.s32.totalorder %s138, %s139
      %p148 = scmp.eq.s32.totalorder %s23, 0
      %p149 = por %p147, %p148
      %p150 = scmp.ne.s32.totalorder %s138, %s139
      %p151 = scmp.eq.s32.totalorder %s24, 1
      %p152 = por %p150, %p151
      %p154 = scmp.ne.s32.totalorder %s139, %s153
      %p155 = scmp.eq.s32.totalorder %s24, 0
      %p156 = por %p154, %p155
      %s158 = sadd.s32 %s157, 1
      %p161 = scmp.eq.s32.totalorder %s18, 1
      %p162 = scmp.ne.s32.totalorder %s157, %s159
      %p163 = scmp.eq.s32.totalorder %s18, 0
      %p164 = por %p162, %p163
      %p165 = scmp.ne.s32.totalorder %s157, %s159
      %p166 = scmp.eq.s32.totalorder %s23, 1
      %p167 = por %p165, %p166
      %p168 = scmp.ne.s32.totalorder %s159, %s160
      %p169 = scmp.eq.s32.totalorder %s23, 0
      %p170 = por %p168, %p169
      %p171 = scmp.ne.s32.totalorder %s159, %s160
      %p172 = scmp.eq.s32.totalorder %s24, 1
      %p173 = por %p171, %p172
      %p175 = scmp.ne.s32.totalorder %s160, %s174
      %p176 = scmp.eq.s32.totalorder %s24, 0
      %p177 = por %p175, %p176
      %s179 = sadd.s32 %s178, 1
      %p182 = scmp.eq.s32.totalorder %s18, 1
      %p183 = scmp.ne.s32.totalorder %s178, %s180
      %p184 = scmp.eq.s32.totalorder %s18, 0
      %p185 = por %p183, %p184
      %p186 = scmp.ne.s32.totalorder %s178, %s180
      %p187 = scmp.eq.s32.totalorder %s23, 1
      %p188 = por %p186, %p187
      %p189 = scmp.ne.s32.totalorder %s180, %s181
      %p190 = scmp.eq.s32.totalorder %s23, 0
      %p191 = por %p189, %p190
      %p192 = scmp.ne.s32.totalorder %s180, %s181
      %p193 = scmp.eq.s32.totalorder %s24, 1
      %p194 = por %p192, %p193
      %p196 = scmp.ne.s32.totalorder %s181, %s195
      %p197 = scmp.eq.s32.totalorder %s24, 0
      %p198 = por %p196, %p197
      %s200 = sadd.s32 %s199, 1
      %p203 = scmp.eq.s32.totalorder %s18, 1
      %p204 = scmp.ne.s32.totalorder %s199, %s201
      %p205 = scmp.eq.s32.totalorder %s18, 0
      %p206 = por %p204, %p205
      %p207 = scmp.ne.s32.totalorder %s199, %s201
      %p208 = scmp.eq.s32.totalorder %s23, 1
      %p209 = por %p207, %p208
      %p210 = scmp.ne.s32.totalorder %s201, %s202
      %p211 = scmp.eq.s32.totalorder %s23, 0
      %p212 = por %p210, %p211
      %p213 = scmp.ne.s32.totalorder %s201, %s202
      %p214 = scmp.eq.s32.totalorder %s24, 1
      %p215 = por %p213, %p214
      %p217 = scmp.ne.s32.totalorder %s202, %s216
      %p218 = scmp.eq.s32.totalorder %s24, 0
      %p219 = por %p217, %p218
      %s220 = ssub.s32 %s18, %s25
      %p221 = scmp.eq.s32.totalorder %s220, 0
      %s223 = sadd.s32 %s222, 1
      %s224 = scalar_select %p221, %s222, %s223
      %p227 = pneg %p221
      %p228 = scmp.eq.s32.totalorder %s18, 1
      %p229 = por %p227, %p228
      %p230 = scmp.ne.s32.totalorder %s222, %s225
      %p231 = scmp.eq.s32.totalorder %s18, 0
      %p232 = por %p230, %p231
      %p233 = scmp.ne.s32.totalorder %s222, %s225
      %p234 = scmp.eq.s32.totalorder %s23, 1
      %p235 = por %p233, %p234
      %p236 = scmp.ne.s32.totalorder %s225, %s226
      %p237 = scmp.eq.s32.totalorder %s23, 0
      %p238 = por %p236, %p237
      %p239 = scmp.ne.s32.totalorder %s225, %s226
      %p240 = scmp.eq.s32.totalorder %s24, 1
      %p241 = por %p239, %p240
      %p243 = scmp.ne.s32.totalorder %s226, %s242
      %p244 = scmp.eq.s32.totalorder %s24, 0
      %p245 = por %p243, %p244
      %p246 = scmp.le.s32.totalorder 1, %s18
      %p247 = scmp.lt.s32.totalorder %s18, 3
      %p248 = pnand %p246, %p247
      %p249 = pneg %p248
      // Predicated region
      $region9: #{tpu_custom_call.1} parent=5 // pred_check
        _
      $region10: #{tpu_custom_call.1} parent=5 // pred_check_branch
        %251 = sbr.rel (%p248) target = $region12
      $region11: #{tpu_custom_call.1} parent=5 // pred_region
        %s252 = ssub.s32 %s18, 1
        // Predicated region
        $region13: #{tpu_custom_call.1} parent=11 // pred_check
          %p253 = pneg %p65
        $region14: #{tpu_custom_call.1} parent=11 // pred_check_branch
          %255 = sbr.rel (%p253) target = $region16
        $region15: #{tpu_custom_call.1} parent=11 // pred_region
          _
        $region16: #{tpu_custom_call.1} parent=11 // pred_fallthru
          _
        // Predicated region
        $region17: #{tpu_custom_call.1} parent=11 // pred_check
          %p256 = pneg %p86
        $region18: #{tpu_custom_call.1} parent=11 // pred_check_branch
          %258 = sbr.rel (%p256) target = $region20
        $region19: #{tpu_custom_call.1} parent=11 // pred_region
          _
        $region20: #{tpu_custom_call.1} parent=11 // pred_fallthru
          _
        // Predicated region
        $region21: #{tpu_custom_call.1} parent=11 // pred_check
          %p259 = pneg %p107
        $region22: #{tpu_custom_call.1} parent=11 // pred_check_branch
          %261 = sbr.rel (%p259) target = $region24
        $region23: #{tpu_custom_call.1} parent=11 // pred_region
          _
        $region24: #{tpu_custom_call.1} parent=11 // pred_fallthru
          _
        // Predicated region
        $region25: #{tpu_custom_call.1} parent=11 // pred_check
          %p262 = pneg %p128
        $region26: #{tpu_custom_call.1} parent=11 // pred_check_branch
          %264 = sbr.rel (%p262) target = $region28
        $region27: #{tpu_custom_call.1} parent=11 // pred_region
          _
        $region28: #{tpu_custom_call.1} parent=11 // pred_fallthru
          _
        // Predicated region
        $region29: #{tpu_custom_call.1} parent=11 // pred_check
          %p265 = pneg %p149
        $region30: #{tpu_custom_call.1} parent=11 // pred_check_branch
          %267 = sbr.rel (%p265) target = $region32
        $region31: #{tpu_custom_call.1} parent=11 // pred_region
          _
        $region32: #{tpu_custom_call.1} parent=11 // pred_fallthru
          _
        // Predicated region
        $region33: #{tpu_custom_call.1} parent=11 // pred_check
          %p268 = pneg %p170
        $region34: #{tpu_custom_call.1} parent=11 // pred_check_branch
          %270 = sbr.rel (%p268) target = $region36
        $region35: #{tpu_custom_call.1} parent=11 // pred_region
          _
        $region36: #{tpu_custom_call.1} parent=11 // pred_fallthru
          _
        // Predicated region
        $region37: #{tpu_custom_call.1} parent=11 // pred_check
          %p271 = pneg %p191
        $region38: #{tpu_custom_call.1} parent=11 // pred_check_branch
          %273 = sbr.rel (%p271) target = $region40
        $region39: #{tpu_custom_call.1} parent=11 // pred_region
          _
        $region40: #{tpu_custom_call.1} parent=11 // pred_fallthru
          _
        // Predicated region
        $region41: #{tpu_custom_call.1} parent=11 // pred_check
          %p274 = pneg %p212
        $region42: #{tpu_custom_call.1} parent=11 // pred_check_branch
          %276 = sbr.rel (%p274) target = $region44
        $region43: #{tpu_custom_call.1} parent=11 // pred_region
          _
        $region44: #{tpu_custom_call.1} parent=11 // pred_fallthru
          _
      $region12: #{tpu_custom_call.1} parent=5 // pred_fallthru
        _
      %p277 = scmp.lt.s32.totalorder %s18, 2
      // Predicated region
      $region45: #{tpu_custom_call.1} parent=5 // pred_check
        %p278 = pneg %p277
      $region46: #{tpu_custom_call.1} parent=5 // pred_check_branch
        %280 = sbr.rel (%p278) target = $region48
      $region47: #{tpu_custom_call.1} parent=5 // pred_region
        // Predicated region
        $region49: #{tpu_custom_call.1} parent=47 // pred_check
          %p281 = pneg %p38
        $region50: #{tpu_custom_call.1} parent=47 // pred_check_branch
          %283 = sbr.rel (%p281) target = $region52
        $region51: #{tpu_custom_call.1} parent=47 // pred_region
          %p284 = scmp.lt.s32.totalorder %s18, 1
          %s285 = scalar_select %p284, %s18, 1
          %s286 = smul.addr %s285, 8
          %s287 = smul.addr %s286, 8
          %s288 = scalar_lea.vmem %s0, %s287
        $region52: #{tpu_custom_call.1} parent=47 // pred_fallthru
          _
      $region48: #{tpu_custom_call.1} parent=5 // pred_fallthru
        _
      %p289 = scmp.le.s32.totalorder 1, %s18
      %p290 = scmp.lt.s32.totalorder %s18, 3
      %p291 = pnand %p289, %p290
      %p292 = pneg %p291
      // Predicated region
      $region53: #{tpu_custom_call.1} parent=5 // pred_check
        _
      $region54: #{tpu_custom_call.1} parent=5 // pred_check_branch
        %294 = sbr.rel (%p291) target = $region56
      $region55: #{tpu_custom_call.1} parent=5 // pred_region
        %s295 = ssub.s32 %s18, 1
        %p296 = scmp.lt.s32.totalorder %s23, 1
        %s297 = scalar_select %p296, %s23, 1
        %s298 = smul.addr %s297, 8
        %s299 = smul.addr %s298, 8
        %s300 = scalar_lea.vmem %s0, %s299
        %p301 = pneg %p44
        %p302 = pneg %p41
        %p303 = pneg %p65
        %p304 = pneg %p62
        %p305 = pneg %p86
        %p306 = pneg %p83
        %p307 = pneg %p107
        %p308 = pneg %p104
        %p309 = pneg %p128
        %p310 = pneg %p125
        %p311 = pneg %p149
        %p312 = pneg %p146
        %p313 = pneg %p170
        %p314 = pneg %p167
        %p315 = pneg %p191
        %p316 = pneg %p188
        %p317 = pneg %p212
        %p318 = pneg %p209
        %p319 = pneg %p238
        %p320 = pneg %p235
        %s321 = sand.u32 %s225, 1
        %s322 = scalar_lea.sflag [#allocation4], %s321
        %s323 = sand.u32 %s225, 1
        %s324 = smul.addr %s323, 64
        %s325 = scalar_lea.vmem [#allocation3], %s324
        %p326 = scmp.lt.s32.totalorder %s23, 1
        %s327 = scalar_select %p326, %s23, 1
        %s328 = smul.addr %s327, 8
        %s329 = smul.addr %s328, 8
        %s330 = scalar_lea.vmem %s0, %s329
        %v332 = vld [vmem:[%s330] sm:$0xff]
        %v333 = vld [vmem:[%s330 + $0x8] sm:$0xff]
        %v334 = vld [vmem:[%s330 + $0x10] sm:$0xff]
        %v335 = vld [vmem:[%s330 + $0x18] sm:$0xff]
        %v336 = vld [vmem:[%s330 + $0x20] sm:$0xff]
        %v337 = vld [vmem:[%s330 + $0x28] sm:$0xff]
        %v338 = vld [vmem:[%s330 + $0x30] sm:$0xff]
        %v339 = vld [vmem:[%s330 + $0x38] sm:$0xff]
        %v340 = vpack.c.bf16 %v333, %v332
        %v341 = vpack.c.bf16 %v335, %v334
        %v342 = vpack.c.bf16 %v337, %v336
        %v343 = vpack.c.bf16 %v339, %v338
        %v344 = vld [vmem:[%s1] sm:$0xf]
        %v345 = vld [vmem:[%s1 + $0x4] sm:$0xf]
        %v346 = vld [vmem:[%s1 + $0x8] sm:$0xf]
        %v347 = vld [vmem:[%s1 + $0xc] sm:$0xf]
        %v348 = vld [vmem:[%s1 + $0x10] sm:$0xf]
        %v349 = vld [vmem:[%s1 + $0x14] sm:$0xf]
        %v350 = vld [vmem:[%s1 + $0x18] sm:$0xf]
        %v351 = vld [vmem:[%s1 + $0x1c] sm:$0xf]
        %v352 = vld [vmem:[%s2] sm:$0x1]
        %v354 = vlaneseq
        %v355 = vshrl.u32 %v354, 7
        %v356 = vsub.s32 0, %v355
        %v357 = vrot.slane %v352, %v356
        %v367 = vunpack.c.l.b16 %v344
        %v368 = vunpack.c.l.b16 %v345
        %v369 = vunpack.c.l.b16 %v346
        %v370 = vunpack.c.l.b16 %v347
        %v371 = vunpack.c.l.b16 %v348
        %v372 = vunpack.c.l.b16 %v349
        %v373 = vunpack.c.l.b16 %v350
        %v374 = vunpack.c.l.b16 %v351
        %v375 = vpack.c.b16 %v368, %v367
        %v376 = vpack.c.b16 %v370, %v369
        %v377 = vpack.c.b16 %v372, %v371
        %v378 = vpack.c.b16 %v374, %v373
        %vm383 = vcmask 523264
        %v385 = vsel %vm383, %v340, 0
        %v388 = vsel %vm383, %v341, 0
        %v391 = vsel %vm383, %v342, 0
        %v394 = vsel %vm383, %v343, 0
        %396 = vmatprep.subr.bf16.mxu0 0
        %397 = vmatpush1.bf16.msra.mxu0 %v375
        %398 = vmatprep.subr.bf16.mxu0 0
        %399 = vmatpush1.bf16.msra.mxu0 %v376
        %400 = vmatprep.subr.bf16.mxu0 0
        %401 = vmatpush1.bf16.msra.mxu0 %v377
        %402 = vmatprep.subr.bf16.mxu0 0
        %403 = vmatpush1.bf16.msra.mxu0 %v378
        %404 = vmatprep.subr.bf16.mxu0 0
        %405 = vmatpush1.bf16.msra.mxu0 0
        %406 = vmatprep.subr.bf16.mxu0 0
        %407 = vmatpush1.bf16.msra.mxu0 0
        %408 = vmatprep.subr.bf16.mxu0 0
        %409 = vmatpush1.bf16.msra.mxu0 0
        %410 = vmatprep.subr.bf16.mxu0 0
        %411 = vmatpush1.bf16.msra.mxu0 0
        %412 = vmatprep.subr.bf16.mxu0 0
        %413 = vmatpush1.bf16.msra.mxu0 0
        %414 = vmatprep.subr.bf16.mxu0 0
        %415 = vmatpush1.bf16.msra.mxu0 0
        %416 = vmatprep.subr.bf16.mxu0 0
        %417 = vmatpush1.bf16.msra.mxu0 0
        %418 = vmatprep.subr.bf16.mxu0 0
        %419 = vmatpush1.bf16.msra.mxu0 0
        %420 = vmatprep.subr.bf16.mxu0 0
        %421 = vmatpush1.bf16.msra.mxu0 0
        %422 = vmatprep.subr.bf16.mxu0 0
        %423 = vmatpush1.bf16.msra.mxu0 0
        %424 = vmatprep.subr.bf16.mxu0 0
        %425 = vmatpush1.bf16.msra.mxu0 0
        %426 = vmatprep.subr.bf16.mxu0 0
        %427 = vmatpush1.bf16.msra.mxu0 0
        %428 = vmatprep.mubr.bf16.mxu0 0
        %429 = vmatmul.mubr.bf16.gmra.mrb[0].mxu0 %v385
        %v430 = vpop.f32.mrb[0].mxu0
        %v431 = vadd.f32 %v357, %v430
        %v432 = vpop.f32.mrb[0].mxu0
        %v433 = vpop.f32.mrb[0].mxu0
        %v434 = vadd.f32 %v357, %v433
        %v435 = vpop.f32.mrb[0].mxu0
        %436 = vmatprep.mubr.bf16.mxu0 0
        %437 = vmatmul.mubr.bf16.gmra.mrb[0].mxu0 %v388
        %v438 = vpop.f32.mrb[0].mxu0
        %v439 = vadd.f32 %v357, %v438
        %v440 = vpop.f32.mrb[0].mxu0
        %v441 = vpop.f32.mrb[0].mxu0
        %v442 = vadd.f32 %v357, %v441
        %v443 = vpop.f32.mrb[0].mxu0
        %444 = vmatprep.mubr.bf16.mxu0 0
        %445 = vmatmul.mubr.bf16.gmra.mrb[0].mxu0 %v391
        %v446 = vpop.f32.mrb[0].mxu0
        %v447 = vadd.f32 %v357, %v446
        %v448 = vpop.f32.mrb[0].mxu0
        %v449 = vpop.f32.mrb[0].mxu0
        %v450 = vadd.f32 %v357, %v449
        %v451 = vpop.f32.mrb[0].mxu0
        %452 = vmatprep.mubr.bf16.mxu0 0
        %453 = vmatmul.mubr.bf16.gmra.mrb[0].mxu0 %v394
        %v454 = vpop.f32.mrb[0].mxu0
        %v455 = vadd.f32 %v357, %v454
        %v456 = vpop.f32.mrb[0].mxu0
        %v457 = vpop.f32.mrb[0].mxu0
        %v458 = vadd.f32 %v357, %v457
        %v459 = vpop.f32.mrb[0].mxu0
        %460 = vdwg.mxu0
        %v461 = vmax.f32 %v431, 0.0
        %v462 = vmax.f32 %v434, 0.0
        %v463 = vmax.f32 %v439, 0.0
        %v464 = vmax.f32 %v442, 0.0
        %v465 = vmax.f32 %v447, 0.0
        %v466 = vmax.f32 %v450, 0.0
        %v467 = vmax.f32 %v455, 0.0
        %v468 = vmax.f32 %v458, 0.0
        %vm469 = vcmask 130048
        %470 = vst.msk [vmem:[#allocation2] sm:$0xff] %vm469, 0.0
        %vm471 = vcmask 123904
        %472 = vst.msk [vmem:[#allocation2 + $0x8] sm:$0x3] %vm471, 0.0
        %s473 = scalar_lea.vmem [#allocation2], 144
        %474 = vst.msk [vmem:[%s473] sm:$0xff] %vm469, 0.0
        %475 = vst.msk [vmem:[%s473 + $0x8] sm:$0x3] %vm471, 0.0
        %vm476 = vcmask 122880
        %477 = vst.msk [vmem:[#allocation2] sm:$0x1] %vm476, 0.0
        %478 = vst.msk [vmem:[#allocation2 + $0x10] sm:$0x1] %vm476, 0.0
        %479 = vst.msk [vmem:[#allocation2 + $0x20] sm:$0x1] %vm476, 0.0
        %480 = vst.msk [vmem:[#allocation2 + $0x30] sm:$0x1] %vm476, 0.0
        %481 = vst.msk [vmem:[#allocation2 + $0x40] sm:$0x1] %vm476, 0.0
        %482 = vst.msk [vmem:[#allocation2 + $0x50] sm:$0x1] %vm476, 0.0
        %483 = vst.msk [vmem:[#allocation2 + $0x60] sm:$0x1] %vm476, 0.0
        %484 = vst.msk [vmem:[#allocation2 + $0x70] sm:$0x1] %vm476, 0.0
        %485 = vst.msk [vmem:[#allocation2 + $0x80] sm:$0x1] %vm476, 0.0
        %486 = vst.msk [vmem:[#allocation2 + $0x90] sm:$0x1] %vm476, 0.0
        %487 = vst.msk [vmem:[#allocation2 + $0x9] sm:$0x1] %vm476, 0.0
        %488 = vst.msk [vmem:[#allocation2 + $0x19] sm:$0x1] %vm476, 0.0
        %489 = vst.msk [vmem:[#allocation2 + $0x29] sm:$0x1] %vm476, 0.0
        %490 = vst.msk [vmem:[#allocation2 + $0x39] sm:$0x1] %vm476, 0.0
        %491 = vst.msk [vmem:[#allocation2 + $0x49] sm:$0x1] %vm476, 0.0
        %492 = vst.msk [vmem:[#allocation2 + $0x59] sm:$0x1] %vm476, 0.0
        %493 = vst.msk [vmem:[#allocation2 + $0x69] sm:$0x1] %vm476, 0.0
        %494 = vst.msk [vmem:[#allocation2 + $0x79] sm:$0x1] %vm476, 0.0
        %495 = vst.msk [vmem:[#allocation2 + $0x89] sm:$0x1] %vm476, 0.0
        %496 = vst.msk [vmem:[#allocation2 + $0x99] sm:$0x1] %vm476, 0.0
        %s497 = scalar_lea.vmem [#allocation2], 16
        %498 = vst.msk [vmem:[%s497 + $0x1] sm:$0xff] %vm469, %v461
        %499 = vst.msk [vmem:[%s497 + $0x11] sm:$0xff] %vm469, %v462
        %500 = vst.msk [vmem:[%s497 + $0x21] sm:$0xff] %vm469, %v463
        %501 = vst.msk [vmem:[%s497 + $0x31] sm:$0xff] %vm469, %v464
        %502 = vst.msk [vmem:[%s497 + $0x41] sm:$0xff] %vm469, %v465
        %503 = vst.msk [vmem:[%s497 + $0x51] sm:$0xff] %vm469, %v466
        %504 = vst.msk [vmem:[%s497 + $0x61] sm:$0xff] %vm469, %v467
        %505 = vst.msk [vmem:[%s497 + $0x71] sm:$0xff] %vm469, %v468
        %v506 = vld [vmem:[#allocation2] sm:$0xff]
        %v507 = vld [vmem:[#allocation2 + $0x10] sm:$0xff]
        %v508 = vld [vmem:[#allocation2 + $0x20] sm:$0xff]
        %v509 = vld [vmem:[#allocation2 + $0x30] sm:$0xff]
        %v510 = vld [vmem:[#allocation2 + $0x40] sm:$0xff]
        %v511 = vld [vmem:[#allocation2 + $0x50] sm:$0xff]
        %v512 = vld [vmem:[#allocation2 + $0x60] sm:$0xff]
        %v513 = vld [vmem:[#allocation2 + $0x70] sm:$0xff]
        %v514 = vld [vmem:[#allocation2 + $0x1] sm:$0xff]
        %v515 = vld [vmem:[#allocation2 + $0x11] sm:$0xff]
        %v516 = vld [vmem:[#allocation2 + $0x21] sm:$0xff]
        %v517 = vld [vmem:[#allocation2 + $0x31] sm:$0xff]
        %v518 = vld [vmem:[#allocation2 + $0x41] sm:$0xff]
        %v519 = vld [vmem:[#allocation2 + $0x51] sm:$0xff]
        %v520 = vld [vmem:[#allocation2 + $0x61] sm:$0xff]
        %v521 = vld [vmem:[#allocation2 + $0x71] sm:$0xff]
        %v522 = vld [vmem:[#allocation2 + $0x2] sm:$0xff]
        %v523 = vld [vmem:[#allocation2 + $0x12] sm:$0xff]
        %v524 = vld [vmem:[#allocation2 + $0x22] sm:$0xff]
        %v525 = vld [vmem:[#allocation2 + $0x32] sm:$0xff]
        %v526 = vld [vmem:[#allocation2 + $0x42] sm:$0xff]
        %v527 = vld [vmem:[#allocation2 + $0x52] sm:$0xff]
        %v528 = vld [vmem:[#allocation2 + $0x62] sm:$0xff]
        %v529 = vld [vmem:[#allocation2 + $0x72] sm:$0xff]
        %v530 = vld [vmem:[%s497] sm:$0xff]
        %v531 = vld [vmem:[%s497 + $0x10] sm:$0xff]
        %v532 = vld [vmem:[%s497 + $0x20] sm:$0xff]
        %v533 = vld [vmem:[%s497 + $0x30] sm:$0xff]
        %v534 = vld [vmem:[%s497 + $0x40] sm:$0xff]
        %v535 = vld [vmem:[%s497 + $0x50] sm:$0xff]
        %v536 = vld [vmem:[%s497 + $0x60] sm:$0xff]
        %v537 = vld [vmem:[%s497 + $0x70] sm:$0xff]
        %v538 = vld [vmem:[%s497 + $0x1] sm:$0xff]
        %v539 = vld [vmem:[%s497 + $0x11] sm:$0xff]
        %v540 = vld [vmem:[%s497 + $0x21] sm:$0xff]
        %v541 = vld [vmem:[%s497 + $0x31] sm:$0xff]
        %v542 = vld [vmem:[%s497 + $0x41] sm:$0xff]
        %v543 = vld [vmem:[%s497 + $0x51] sm:$0xff]
        %v544 = vld [vmem:[%s497 + $0x61] sm:$0xff]
        %v545 = vld [vmem:[%s497 + $0x71] sm:$0xff]
        %v546 = vld [vmem:[%s497 + $0x2] sm:$0xff]
        %v547 = vld [vmem:[%s497 + $0x12] sm:$0xff]
        %v548 = vld [vmem:[%s497 + $0x22] sm:$0xff]
        %v549 = vld [vmem:[%s497 + $0x32] sm:$0xff]
        %v550 = vld [vmem:[%s497 + $0x42] sm:$0xff]
        %v551 = vld [vmem:[%s497 + $0x52] sm:$0xff]
        %v552 = vld [vmem:[%s497 + $0x62] sm:$0xff]
        %v553 = vld [vmem:[%s497 + $0x72] sm:$0xff]
        %s554 = scalar_lea.vmem [#allocation2], 32
        %v555 = vld [vmem:[%s554] sm:$0xff]
        %v556 = vld [vmem:[%s554 + $0x10] sm:$0xff]
        %v557 = vld [vmem:[%s554 + $0x20] sm:$0xff]
        %v558 = vld [vmem:[%s554 + $0x30] sm:$0xff]
        %v559 = vld [vmem:[%s554 + $0x40] sm:$0xff]
        %v560 = vld [vmem:[%s554 + $0x50] sm:$0xff]
        %v561 = vld [vmem:[%s554 + $0x60] sm:$0xff]
        %v562 = vld [vmem:[%s554 + $0x70] sm:$0xff]
        %v563 = vld [vmem:[%s554 + $0x1] sm:$0xff]
        %v564 = vld [vmem:[%s554 + $0x11] sm:$0xff]
        %v565 = vld [vmem:[%s554 + $0x21] sm:$0xff]
        %v566 = vld [vmem:[%s554 + $0x31] sm:$0xff]
        %v567 = vld [vmem:[%s554 + $0x41] sm:$0xff]
        %v568 = vld [vmem:[%s554 + $0x51] sm:$0xff]
        %v569 = vld [vmem:[%s554 + $0x61] sm:$0xff]
        %v570 = vld [vmem:[%s554 + $0x71] sm:$0xff]
        %v571 = vld [vmem:[%s554 + $0x2] sm:$0xff]
        %v572 = vld [vmem:[%s554 + $0x12] sm:$0xff]
        %v573 = vld [vmem:[%s554 + $0x22] sm:$0xff]
        %v574 = vld [vmem:[%s554 + $0x32] sm:$0xff]
        %v575 = vld [vmem:[%s554 + $0x42] sm:$0xff]
        %v576 = vld [vmem:[%s554 + $0x52] sm:$0xff]
        %v577 = vld [vmem:[%s554 + $0x62] sm:$0xff]
        %v578 = vld [vmem:[%s554 + $0x72] sm:$0xff]
        %587 = vrot.lane.b32.xlu0 %v514, 16
        %v588 = vpop.permute.xlu0 %587
        %589 = vrot.lane.b32.xlu0 %v515, 16
        %v590 = vpop.permute.xlu0 %589
        %591 = vrot.lane.b32.xlu0 %v516, 16
        %v592 = vpop.permute.xlu0 %591
        %593 = vrot.lane.b32.xlu0 %v517, 16
        %v594 = vpop.permute.xlu0 %593
        %595 = vrot.lane.b32.xlu0 %v518, 16
        %v596 = vpop.permute.xlu0 %595
        %597 = vrot.lane.b32.xlu0 %v519, 16
        %v598 = vpop.permute.xlu0 %597
        %599 = vrot.lane.b32.xlu0 %v520, 16
        %v600 = vpop.permute.xlu0 %599
        %601 = vrot.lane.b32.xlu0 %v521, 16
        %v602 = vpop.permute.xlu0 %601
        %619 = vrot.lane.b32.xlu0 %v522, 32
        %v620 = vpop.permute.xlu0 %619
        %621 = vrot.lane.b32.xlu0 %v523, 32
        %v622 = vpop.permute.xlu0 %621
        %623 = vrot.lane.b32.xlu0 %v524, 32
        %v624 = vpop.permute.xlu0 %623
        %625 = vrot.lane.b32.xlu0 %v525, 32
        %v626 = vpop.permute.xlu0 %625
        %627 = vrot.lane.b32.xlu0 %v526, 32
        %v628 = vpop.permute.xlu0 %627
        %629 = vrot.lane.b32.xlu0 %v527, 32
        %v630 = vpop.permute.xlu0 %629
        %631 = vrot.lane.b32.xlu0 %v528, 32
        %v632 = vpop.permute.xlu0 %631
        %633 = vrot.lane.b32.xlu0 %v529, 32
        %v634 = vpop.permute.xlu0 %633
        %651 = vrot.lane.b32.xlu0 %v530, 48
        %v652 = vpop.permute.xlu0 %651
        %653 = vrot.lane.b32.xlu0 %v531, 48
        %v654 = vpop.permute.xlu0 %653
        %655 = vrot.lane.b32.xlu0 %v532, 48
        %v656 = vpop.permute.xlu0 %655
        %657 = vrot.lane.b32.xlu0 %v533, 48
        %v658 = vpop.permute.xlu0 %657
        %659 = vrot.lane.b32.xlu0 %v534, 48
        %v660 = vpop.permute.xlu0 %659
        %661 = vrot.lane.b32.xlu0 %v535, 48
        %v662 = vpop.permute.xlu0 %661
        %663 = vrot.lane.b32.xlu0 %v536, 48
        %v664 = vpop.permute.xlu0 %663
        %665 = vrot.lane.b32.xlu0 %v537, 48
        %v666 = vpop.permute.xlu0 %665
        %683 = vrot.lane.b32.xlu0 %v538, 64
        %v684 = vpop.permute.xlu0 %683
        %685 = vrot.lane.b32.xlu0 %v539, 64
        %v686 = vpop.permute.xlu0 %685
        %687 = vrot.lane.b32.xlu0 %v540, 64
        %v688 = vpop.permute.xlu0 %687
        %689 = vrot.lane.b32.xlu0 %v541, 64
        %v690 = vpop.permute.xlu0 %689
        %691 = vrot.lane.b32.xlu0 %v542, 64
        %v692 = vpop.permute.xlu0 %691
        %693 = vrot.lane.b32.xlu0 %v543, 64
        %v694 = vpop.permute.xlu0 %693
        %695 = vrot.lane.b32.xlu0 %v544, 64
        %v696 = vpop.permute.xlu0 %695
        %697 = vrot.lane.b32.xlu0 %v545, 64
        %v698 = vpop.permute.xlu0 %697
        %715 = vrot.lane.b32.xlu0 %v546, 80
        %v716 = vpop.permute.xlu0 %715
        %717 = vrot.lane.b32.xlu0 %v547, 80
        %v718 = vpop.permute.xlu0 %717
        %719 = vrot.lane.b32.xlu0 %v548, 80
        %v720 = vpop.permute.xlu0 %719
        %721 = vrot.lane.b32.xlu0 %v549, 80
        %v722 = vpop.permute.xlu0 %721
        %723 = vrot.lane.b32.xlu0 %v550, 80
        %v724 = vpop.permute.xlu0 %723
        %725 = vrot.lane.b32.xlu0 %v551, 80
        %v726 = vpop.permute.xlu0 %725
        %727 = vrot.lane.b32.xlu0 %v552, 80
        %v728 = vpop.permute.xlu0 %727
        %729 = vrot.lane.b32.xlu0 %v553, 80
        %v730 = vpop.permute.xlu0 %729
        %747 = vrot.lane.b32.xlu0 %v555, 96
        %v748 = vpop.permute.xlu0 %747
        %749 = vrot.lane.b32.xlu0 %v556, 96
        %v750 = vpop.permute.xlu0 %749
        %751 = vrot.lane.b32.xlu0 %v557, 96
        %v752 = vpop.permute.xlu0 %751
        %753 = vrot.lane.b32.xlu0 %v558, 96
        %v754 = vpop.permute.xlu0 %753
        %755 = vrot.lane.b32.xlu0 %v559, 96
        %v756 = vpop.permute.xlu0 %755
        %757 = vrot.lane.b32.xlu0 %v560, 96
        %v758 = vpop.permute.xlu0 %757
        %759 = vrot.lane.b32.xlu0 %v561, 96
        %v760 = vpop.permute.xlu0 %759
        %761 = vrot.lane.b32.xlu0 %v562, 96
        %v762 = vpop.permute.xlu0 %761
        %779 = vrot.lane.b32.xlu0 %v563, 112
        %v780 = vpop.permute.xlu0 %779
        %781 = vrot.lane.b32.xlu0 %v564, 112
        %v782 = vpop.permute.xlu0 %781
        %783 = vrot.lane.b32.xlu0 %v565, 112
        %v784 = vpop.permute.xlu0 %783
        %785 = vrot.lane.b32.xlu0 %v566, 112
        %v786 = vpop.permute.xlu0 %785
        %787 = vrot.lane.b32.xlu0 %v567, 112
        %v788 = vpop.permute.xlu0 %787
        %789 = vrot.lane.b32.xlu0 %v568, 112
        %v790 = vpop.permute.xlu0 %789
        %791 = vrot.lane.b32.xlu0 %v569, 112
        %v792 = vpop.permute.xlu0 %791
        %793 = vrot.lane.b32.xlu0 %v570, 112
        %v794 = vpop.permute.xlu0 %793
        %v803 = vsel %vm469, %v506, %v588
        %v804 = vsel %vm469, %v507, %v590
        %v805 = vsel %vm469, %v508, %v592
        %v806 = vsel %vm469, %v509, %v594
        %v807 = vsel %vm469, %v510, %v596
        %v808 = vsel %vm469, %v511, %v598
        %v809 = vsel %vm469, %v512, %v600
        %v810 = vsel %vm469, %v513, %v602
        %vm811 = vcmask 261120
        %v812 = vsel %vm811, %v803, %v620
        %v813 = vsel %vm811, %v804, %v622
        %v814 = vsel %vm811, %v805, %v624
        %v815 = vsel %vm811, %v806, %v626
        %v816 = vsel %vm811, %v807, %v628
        %v817 = vsel %vm811, %v808, %v630
        %v818 = vsel %vm811, %v809, %v632
        %v819 = vsel %vm811, %v810, %v634
        %vm820 = vcmask 392192
        %v821 = vsel %vm820, %v812, %v652
        %v822 = vsel %vm820, %v813, %v654
        %v823 = vsel %vm820, %v814, %v656
        %v824 = vsel %vm820, %v815, %v658
        %v825 = vsel %vm820, %v816, %v660
        %v826 = vsel %vm820, %v817, %v662
        %v827 = vsel %vm820, %v818, %v664
        %v828 = vsel %vm820, %v819, %v666
        %v829 = vsel %vm383, %v821, %v684
        %v830 = vsel %vm383, %v822, %v686
        %v831 = vsel %vm383, %v823, %v688
        %v832 = vsel %vm383, %v824, %v690
        %v833 = vsel %vm383, %v825, %v692
        %v834 = vsel %vm383, %v826, %v694
        %v835 = vsel %vm383, %v827, %v696
        %v836 = vsel %vm383, %v828, %v698
        %vm837 = vcmask 654336
        %v838 = vsel %vm837, %v829, %v716
        %v839 = vsel %vm837, %v830, %v718
        %v840 = vsel %vm837, %v831, %v720
        %v841 = vsel %vm837, %v832, %v722
        %v842 = vsel %vm837, %v833, %v724
        %v843 = vsel %vm837, %v834, %v726
        %v844 = vsel %vm837, %v835, %v728
        %v845 = vsel %vm837, %v836, %v730
        %vm846 = vcmask 785408
        %v847 = vsel %vm846, %v838, %v748
        %v848 = vsel %vm846, %v839, %v750
        %v849 = vsel %vm846, %v840, %v752
        %v850 = vsel %vm846, %v841, %v754
        %v851 = vsel %vm846, %v842, %v756
        %v852 = vsel %vm846, %v843, %v758
        %v853 = vsel %vm846, %v844, %v760
        %v854 = vsel %vm846, %v845, %v762
        %vm855 = vcmask 916480
        %v856 = vsel %vm855, %v847, %v780
        %v857 = vsel %vm855, %v848, %v782
        %v858 = vsel %vm855, %v849, %v784
        %v859 = vsel %vm855, %v850, %v786
        %v860 = vsel %vm855, %v851, %v788
        %v861 = vsel %vm855, %v852, %v790
        %v862 = vsel %vm855, %v853, %v792
        %v863 = vsel %vm855, %v854, %v794
        %v864 = vpack.c.bf16 %v857, %v856
        %v865 = vpack.c.bf16 %v572, %v571
        %v866 = vpack.c.bf16 %v859, %v858
        %v867 = vpack.c.bf16 %v574, %v573
        %v868 = vpack.c.bf16 %v861, %v860
        %v869 = vpack.c.bf16 %v576, %v575
        %v870 = vpack.c.bf16 %v863, %v862
        %v871 = vpack.c.bf16 %v578, %v577
        %v872 = vld [vmem:[%s3] sm:$0xf]
        %v873 = vld [vmem:[%s3 + $0x4] sm:$0xf]
        %v874 = vld [vmem:[%s3 + $0x8] sm:$0xf]
        %v875 = vld [vmem:[%s3 + $0xc] sm:$0xf]
        %v876 = vld [vmem:[%s3 + $0x10] sm:$0xf]
        %v877 = vld [vmem:[%s3 + $0x14] sm:$0xf]
        %v878 = vld [vmem:[%s3 + $0x18] sm:$0xf]
        %v879 = vld [vmem:[%s3 + $0x1c] sm:$0xf]
        %v880 = vld [vmem:[%s3 + $0x20] sm:$0xf]
        %v881 = vld [vmem:[%s3 + $0x24] sm:$0xf]
        %v882 = vld [vmem:[%s3 + $0x28] sm:$0xf]
        %v883 = vld [vmem:[%s3 + $0x2c] sm:$0xf]
        %v884 = vld [vmem:[%s3 + $0x30] sm:$0xf]
        %v885 = vld [vmem:[%s3 + $0x34] sm:$0xf]
        %v886 = vld [vmem:[%s3 + $0x38] sm:$0xf]
        %v887 = vld [vmem:[%s3 + $0x3c] sm:$0xf]
        %v888 = vld [vmem:[%s3 + $0x40] sm:$0xf]
        %v889 = vld [vmem:[%s3 + $0x44] sm:$0xf]
        %v890 = vld [vmem:[%s4] sm:$0x1]
        %v892 = vlaneseq
        %v893 = vshrl.u32 %v892, 7
        %v894 = vsub.s32 0, %v893
        %v895 = vrot.slane %v890, %v894
        %v915 = vunpack.c.l.b16 %v872
        %v916 = vunpack.c.l.b16 %v873
        %v917 = vunpack.c.l.b16 %v874
        %v918 = vunpack.c.l.b16 %v875
        %v919 = vunpack.c.l.b16 %v876
        %v920 = vunpack.c.l.b16 %v877
        %v921 = vunpack.c.l.b16 %v878
        %v922 = vunpack.c.l.b16 %v879
        %v923 = vunpack.c.l.b16 %v880
        %v924 = vunpack.c.l.b16 %v881
        %v925 = vunpack.c.l.b16 %v882
        %v926 = vunpack.c.l.b16 %v883
        %v927 = vunpack.c.l.b16 %v884
        %v928 = vunpack.c.l.b16 %v885
        %v929 = vunpack.c.l.b16 %v886
        %v930 = vunpack.c.l.b16 %v887
        %v931 = vunpack.c.l.b16 %v888
        %v932 = vunpack.c.l.b16 %v889
        %v933 = vpack.c.b16 %v916, %v915
        %v934 = vpack.c.b16 %v918, %v917
        %v935 = vpack.c.b16 %v920, %v919
        %v936 = vpack.c.b16 %v922, %v921
        %v937 = vpack.c.b16 %v924, %v923
        %v938 = vpack.c.b16 %v926, %v925
        %v939 = vpack.c.b16 %v928, %v927
        %v940 = vpack.c.b16 %v930, %v929
        %v941 = vpack.c.b16 %v932, %v931
        %v952 = vsel %vm469, %v865, 0
        %v955 = vsel %vm469, %v867, 0
        %v958 = vsel %vm469, %v869, 0
        %v961 = vsel %vm469, %v871, 0
        %963 = vmatprep.subr.bf16.mxu0 0
        %964 = vmatpush1.bf16.msra.mxu0 %v933
        %965 = vmatprep.subr.bf16.mxu0 0
        %966 = vmatpush1.bf16.msra.mxu0 %v934
        %967 = vmatprep.subr.bf16.mxu0 0
        %968 = vmatpush1.bf16.msra.mxu0 %v935
        %969 = vmatprep.subr.bf16.mxu0 0
        %970 = vmatpush1.bf16.msra.mxu0 %v936
        %971 = vmatprep.subr.bf16.mxu0 0
        %972 = vmatpush1.bf16.msra.mxu0 %v937
        %973 = vmatprep.subr.bf16.mxu0 0
        %974 = vmatpush1.bf16.msra.mxu0 %v938
        %975 = vmatprep.subr.bf16.mxu0 0
        %976 = vmatpush1.bf16.msra.mxu0 %v939
        %977 = vmatprep.subr.bf16.mxu0 0
        %978 = vmatpush1.bf16.msra.mxu0 %v940
        %979 = vmatprep.subr.bf16.mxu0 0
        %980 = vmatpush1.bf16.msra.mxu0 %v941
        %981 = vmatprep.subr.bf16.mxu0 0
        %982 = vmatpush1.bf16.msra.mxu0 0
        %983 = vmatprep.subr.bf16.mxu0 0
        %984 = vmatpush1.bf16.msra.mxu0 0
        %985 = vmatprep.subr.bf16.mxu0 0
        %986 = vmatpush1.bf16.msra.mxu0 0
        %987 = vmatprep.subr.bf16.mxu0 0
        %988 = vmatpush1.bf16.msra.mxu0 0
        %989 = vmatprep.subr.bf16.mxu0 0
        %990 = vmatpush1.bf16.msra.mxu0 0
        %991 = vmatprep.subr.bf16.mxu0 0
        %992 = vmatpush1.bf16.msra.mxu0 0
        %993 = vmatprep.subr.bf16.mxu0 0
        %994 = vmatpush1.bf16.msra.mxu0 0
        %995 = vmatprep.mubr.bf16.mxu0 %v952
        %996 = vmatmul.mubr.bf16.gmra.mrb[0].mxu0 %v864
        %v997 = vpop.f32.mrb[0].mxu0
        %v998 = vadd.f32 %v895, %v997
        %v999 = vpop.f32.mrb[0].mxu0
        %v1000 = vpop.f32.mrb[0].mxu0
        %v1001 = vadd.f32 %v895, %v1000
        %v1002 = vpop.f32.mrb[0].mxu0
        %1003 = vmatprep.mubr.bf16.mxu0 %v955
        %1004 = vmatmul.mubr.bf16.gmra.mrb[0].mxu0 %v866
        %v1005 = vpop.f32.mrb[0].mxu0
        %v1006 = vadd.f32 %v895, %v1005
        %v1007 = vpop.f32.mrb[0].mxu0
        %v1008 = vpop.f32.mrb[0].mxu0
        %v1009 = vadd.f32 %v895, %v1008
        %v1010 = vpop.f32.mrb[0].mxu0
        %1011 = vmatprep.mubr.bf16.mxu0 %v958
        %1012 = vmatmul.mubr.bf16.gmra.mrb[0].mxu0 %v868
        %v1013 = vpop.f32.mrb[0].mxu0
        %v1014 = vadd.f32 %v895, %v1013
        %v1015 = vpop.f32.mrb[0].mxu0
        %v1016 = vpop.f32.mrb[0].mxu0
        %v1017 = vadd.f32 %v895, %v1016
        %v1018 = vpop.f32.mrb[0].mxu0
        %1019 = vmatprep.mubr.bf16.mxu0 %v961
        %1020 = vmatmul.mubr.bf16.gmra.mrb[0].mxu0 %v870
        %v1021 = vpop.f32.mrb[0].mxu0
        %v1022 = vadd.f32 %v895, %v1021
        %v1023 = vpop.f32.mrb[0].mxu0
        %v1024 = vpop.f32.mrb[0].mxu0
        %v1025 = vadd.f32 %v895, %v1024
        %v1026 = vpop.f32.mrb[0].mxu0
        %1027 = vdwg.mxu0
        %v1028 = vmax.f32 %v998, 0.0
        %v1029 = vmax.f32 %v1001, 0.0
        %v1030 = vmax.f32 %v1006, 0.0
        %v1031 = vmax.f32 %v1009, 0.0
        %v1032 = vmax.f32 %v1014, 0.0
        %v1033 = vmax.f32 %v1017, 0.0
        %v1034 = vmax.f32 %v1022, 0.0
        %v1035 = vmax.f32 %v1025, 0.0
        %v1036 = vpack.c.bf16 %v1029, %v1028
        %v1037 = vpack.c.bf16 %v1031, %v1030
        %v1038 = vpack.c.bf16 %v1033, %v1032
        %v1039 = vpack.c.bf16 %v1035, %v1034
        %v1040 = vld [vmem:[%s5] sm:$0xf]
        %v1041 = vld [vmem:[%s5 + $0x4] sm:$0xf]
        %v1042 = vld [vmem:[%s6] sm:$0x1]
        %v1044 = vlaneseq
        %v1045 = vshrl.u32 %v1044, 7
        %v1046 = vsub.s32 0, %v1045
        %v1047 = vrot.slane %v1042, %v1046
        %v1051 = vunpack.c.l.b16 %v1040
        %v1052 = vunpack.c.l.b16 %v1041
        %v1053 = vpack.c.b16 %v1052, %v1051
        %v1056 = vsel %vm469, %v1036, 0
        %v1059 = vsel %vm469, %v1037, 0
        %v1062 = vsel %vm469, %v1038, 0
        %v1065 = vsel %vm469, %v1039, 0
        %1067 = vmatprep.subr.bf16.mxu0 0
        %1068 = vmatpush1.bf16.msra.mxu0 %v1053
        %1069 = vmatprep.subr.bf16.mxu0 0
        %1070 = vmatpush1.bf16.msra.mxu0 0
        %1071 = vmatprep.subr.bf16.mxu0 0
        %1072 = vmatpush1.bf16.msra.mxu0 0
        %1073 = vmatprep.subr.bf16.mxu0 0
        %1074 = vmatpush1.bf16.msra.mxu0 0
        %1075 = vmatprep.subr.bf16.mxu0 0
        %1076 = vmatpush1.bf16.msra.mxu0 0
        %1077 = vmatprep.subr.bf16.mxu0 0
        %1078 = vmatpush1.bf16.msra.mxu0 0
        %1079 = vmatprep.subr.bf16.mxu0 0
        %1080 = vmatpush1.bf16.msra.mxu0 0
        %1081 = vmatprep.subr.bf16.mxu0 0
        %1082 = vmatpush1.bf16.msra.mxu0 0
        %1083 = vmatprep.subr.bf16.mxu0 0
        %1084 = vmatpush1.bf16.msra.mxu0 0
        %1085 = vmatprep.subr.bf16.mxu0 0
        %1086 = vmatpush1.bf16.msra.mxu0 0
        %1087 = vmatprep.subr.bf16.mxu0 0
        %1088 = vmatpush1.bf16.msra.mxu0 0
        %1089 = vmatprep.subr.bf16.mxu0 0
        %1090 = vmatpush1.bf16.msra.mxu0 0
        %1091 = vmatprep.subr.bf16.mxu0 0
        %1092 = vmatpush1.bf16.msra.mxu0 0
        %1093 = vmatprep.subr.bf16.mxu0 0
        %1094 = vmatpush1.bf16.msra.mxu0 0
        %1095 = vmatprep.subr.bf16.mxu0 0
        %1096 = vmatpush1.bf16.msra.mxu0 0
        %1097 = vmatprep.subr.bf16.mxu0 0
        %1098 = vmatpush1.bf16.msra.mxu0 0
        %1099 = vmatprep.mubr.bf16.mxu0 0
        %1100 = vmatmul.mubr.bf16.gmra.mrb[0].mxu0 %v1056
        %v1101 = vpop.f32.mrb[0].mxu0
        %v1102 = vadd.f32 %v1047, %v1101
        %v1103 = vpop.f32.mrb[0].mxu0
        %v1104 = vpop.f32.mrb[0].mxu0
        %v1105 = vadd.f32 %v1047, %v1104
        %v1106 = vpop.f32.mrb[0].mxu0
        %1107 = vmatprep.mubr.bf16.mxu0 0
        %1108 = vmatmul.mubr.bf16.gmra.mrb[0].mxu0 %v1059
        %v1109 = vpop.f32.mrb[0].mxu0
        %v1110 = vadd.f32 %v1047, %v1109
        %v1111 = vpop.f32.mrb[0].mxu0
        %v1112 = vpop.f32.mrb[0].mxu0
        %v1113 = vadd.f32 %v1047, %v1112
        %v1114 = vpop.f32.mrb[0].mxu0
        %1115 = vmatprep.mubr.bf16.mxu0 0
        %1116 = vmatmul.mubr.bf16.gmra.mrb[0].mxu0 %v1062
        %v1117 = vpop.f32.mrb[0].mxu0
        %v1118 = vadd.f32 %v1047, %v1117
        %v1119 = vpop.f32.mrb[0].mxu0
        %v1120 = vpop.f32.mrb[0].mxu0
        %v1121 = vadd.f32 %v1047, %v1120
        %v1122 = vpop.f32.mrb[0].mxu0
        %1123 = vmatprep.mubr.bf16.mxu0 0
        %1124 = vmatmul.mubr.bf16.gmra.mrb[0].mxu0 %v1065
        %v1125 = vpop.f32.mrb[0].mxu0
        %v1126 = vadd.f32 %v1047, %v1125
        %v1127 = vpop.f32.mrb[0].mxu0
        %v1128 = vpop.f32.mrb[0].mxu0
        %v1129 = vadd.f32 %v1047, %v1128
        %v1130 = vpop.f32.mrb[0].mxu0
        %1131 = vdwg.mxu0
        %v1132 = vsel %vm383, %v1102, 0.0
        %v1133 = vsel %vm383, %v1105, 0.0
        %v1134 = vadd.f32 %v1132, %v1133
        %v1135 = vsel %vm383, %v1110, 0.0
        %v1136 = vadd.f32 %v1134, %v1135
        %v1137 = vsel %vm383, %v1113, 0.0
        %v1138 = vadd.f32 %v1136, %v1137
        %v1139 = vsel %vm383, %v1118, 0.0
        %v1140 = vadd.f32 %v1138, %v1139
        %v1141 = vsel %vm383, %v1121, 0.0
        %v1142 = vadd.f32 %v1140, %v1141
        %v1143 = vsel %vm383, %v1126, 0.0
        %v1144 = vadd.f32 %v1142, %v1143
        %v1145 = vsel %vm383, %v1129, 0.0
        %v1146 = vadd.f32 %v1144, %v1145
        %v1147 = vrot.slane %v1146, 4
        %v1148 = vadd.f32 %v1146, %v1147
        %v1149 = vrot.slane %v1148, 2
        %v1150 = vadd.f32 %v1148, %v1149
        %v1151 = vrot.slane %v1150, 1
        %v1152 = vadd.f32 %v1150, %v1151
        %v1153 = vrcp.pop 64.0
        %v1154 = vmul.f32 %v1152, %v1153
        %v1155 = vld [vmem:[%s7] sm:$0xff]
        %v1156 = vld [vmem:[%s7 + $0x8] sm:$0xff]
        %v1157 = vld [vmem:[%s7 + $0x10] sm:$0xff]
        %v1158 = vld [vmem:[%s7 + $0x18] sm:$0xff]
        %v1159 = vld [vmem:[%s7 + $0x20] sm:$0xff]
        %v1160 = vld [vmem:[%s7 + $0x28] sm:$0xff]
        %v1161 = vld [vmem:[%s7 + $0x30] sm:$0xff]
        %v1162 = vld [vmem:[%s7 + $0x38] sm:$0xff]
        %v1164 = vsel %vm383, %v1154, 0
        %1166 = vmatprep.subr.mxu0 0.0
        %1167 = vmatpush1.msra.mxu0 %v1155
        %1168 = vmatprep.subr.mxu0 0.0
        %1169 = vmatpush1.msra.mxu0 %v1156
        %1170 = vmatprep.subr.mxu0 0.0
        %1171 = vmatpush1.msra.mxu0 %v1157
        %1172 = vmatprep.subr.mxu0 0.0
        %1173 = vmatpush1.msra.mxu0 %v1158
        %1174 = vmatprep.subr.mxu0 0.0
        %1175 = vmatpush1.msra.mxu0 %v1159
        %1176 = vmatprep.subr.mxu0 0.0
        %1177 = vmatpush1.msra.mxu0 %v1160
        %1178 = vmatprep.subr.mxu0 0.0
        %1179 = vmatpush1.msra.mxu0 %v1161
        %1180 = vmatprep.subr.mxu0 0.0
        %1181 = vmatpush1.msra.mxu0 %v1162
        %1182 = vmatprep.subr.mxu0 0.0
        %1183 = vmatpush1.msra.mxu0 0.0
        %1184 = vmatprep.subr.mxu0 0.0
        %1185 = vmatpush1.msra.mxu0 0.0
        %1186 = vmatprep.subr.mxu0 0.0
        %1187 = vmatpush1.msra.mxu0 0.0
        %1188 = vmatprep.subr.mxu0 0.0
        %1189 = vmatpush1.msra.mxu0 0.0
        %1190 = vmatprep.subr.mxu0 0.0
        %1191 = vmatpush1.msra.mxu0 0.0
        %1192 = vmatprep.subr.mxu0 0.0
        %1193 = vmatpush1.msra.mxu0 0.0
        %1194 = vmatprep.subr.mxu0 0.0
        %1195 = vmatpush1.msra.mxu0 0.0
        %1196 = vmatprep.subr.mxu0 0.0
        %1197 = vmatpush1.msra.mxu0 0.0
        %1198 = vmatprep.subr.mxu0 0.0
        %1199 = vmatpush1.msra.mxu0 0.0
        %1200 = vmatprep.subr.mxu0 0.0
        %1201 = vmatpush1.msra.mxu0 0.0
        %1202 = vmatprep.subr.mxu0 0.0
        %1203 = vmatpush1.msra.mxu0 0.0
        %1204 = vmatprep.subr.mxu0 0.0
        %1205 = vmatpush1.msra.mxu0 0.0
        %1206 = vmatprep.subr.mxu0 0.0
        %1207 = vmatpush1.msra.mxu0 0.0
        %1208 = vmatprep.subr.mxu0 0.0
        %1209 = vmatpush1.msra.mxu0 0.0
        %1210 = vmatprep.subr.mxu0 0.0
        %1211 = vmatpush1.msra.mxu0 0.0
        %1212 = vmatprep.subr.mxu0 0.0
        %1213 = vmatpush1.msra.mxu0 0.0
        %1214 = vmatprep.subr.mxu0 0.0
        %1215 = vmatpush1.msra.mxu0 0.0
        %1216 = vmatprep.subr.mxu0 0.0
        %1217 = vmatpush1.msra.mxu0 0.0
        %1218 = vmatprep.subr.mxu0 0.0
        %1219 = vmatpush1.msra.mxu0 0.0
        %1220 = vmatprep.subr.mxu0 0.0
        %1221 = vmatpush1.msra.mxu0 0.0
        %1222 = vmatprep.subr.mxu0 0.0
        %1223 = vmatpush1.msra.mxu0 0.0
        %1224 = vmatprep.subr.mxu0 0.0
        %1225 = vmatpush1.msra.mxu0 0.0
        %1226 = vmatprep.subr.mxu0 0.0
        %1227 = vmatpush1.msra.mxu0 0.0
        %1228 = vmatprep.subr.mxu0 0.0
        %1229 = vmatpush1.msra.mxu0 0.0
        %1230 = vmatprep.mubr.f32.mxu0 0.0
        %1231 = vmatmul.mubr.f32.gmra.mrb[0].mxu0 %v1164
        %v1232 = vpop.f32.mrb[0].mxu0
        %v1233 = vadd.f32 0.0, %v1232
        %v1234 = vpop.f32.mrb[0].mxu0
        %1235 = vdwg.mxu0
        %v1236 = vmax.f32 %v1233, 0.0
        %v1237 = vld [vmem:[%s8] sm:$0xf]
        %vm1238 = vcmask 31744
        %v1240 = vsel %vm1238, %v1236, 0
        %vm1242 = vcmask 1043456
        %v1244 = vsel %vm1242, %v1237, 0
        %1246 = vmatprep.subr.mxu0 0.0
        %1247 = vmatpush1.msra.mxu0 %v1244
        %1248 = vmatprep.subr.mxu0 0.0
        %1249 = vmatpush1.msra.mxu0 0.0
        %1250 = vmatprep.subr.mxu0 0.0
        %1251 = vmatpush1.msra.mxu0 0.0
        %1252 = vmatprep.subr.mxu0 0.0
        %1253 = vmatpush1.msra.mxu0 0.0
        %1254 = vmatprep.subr.mxu0 0.0
        %1255 = vmatpush1.msra.mxu0 0.0
        %1256 = vmatprep.subr.mxu0 0.0
        %1257 = vmatpush1.msra.mxu0 0.0
        %1258 = vmatprep.subr.mxu0 0.0
        %1259 = vmatpush1.msra.mxu0 0.0
        %1260 = vmatprep.subr.mxu0 0.0
        %1261 = vmatpush1.msra.mxu0 0.0
        %1262 = vmatprep.subr.mxu0 0.0
        %1263 = vmatpush1.msra.mxu0 0.0
        %1264 = vmatprep.subr.mxu0 0.0
        %1265 = vmatpush1.msra.mxu0 0.0
        %1266 = vmatprep.subr.mxu0 0.0
        %1267 = vmatpush1.msra.mxu0 0.0
        %1268 = vmatprep.subr.mxu0 0.0
        %1269 = vmatpush1.msra.mxu0 0.0
        %1270 = vmatprep.subr.mxu0 0.0
        %1271 = vmatpush1.msra.mxu0 0.0
        %1272 = vmatprep.subr.mxu0 0.0
        %1273 = vmatpush1.msra.mxu0 0.0
        %1274 = vmatprep.subr.mxu0 0.0
        %1275 = vmatpush1.msra.mxu0 0.0
        %1276 = vmatprep.subr.mxu0 0.0
        %1277 = vmatpush1.msra.mxu0 0.0
        %1278 = vmatprep.subr.mxu0 0.0
        %1279 = vmatpush1.msra.mxu0 0.0
        %1280 = vmatprep.subr.mxu0 0.0
        %1281 = vmatpush1.msra.mxu0 0.0
        %1282 = vmatprep.subr.mxu0 0.0
        %1283 = vmatpush1.msra.mxu0 0.0
        %1284 = vmatprep.subr.mxu0 0.0
        %1285 = vmatpush1.msra.mxu0 0.0
        %1286 = vmatprep.subr.mxu0 0.0
        %1287 = vmatpush1.msra.mxu0 0.0
        %1288 = vmatprep.subr.mxu0 0.0
        %1289 = vmatpush1.msra.mxu0 0.0
        %1290 = vmatprep.subr.mxu0 0.0
        %1291 = vmatpush1.msra.mxu0 0.0
        %1292 = vmatprep.subr.mxu0 0.0
        %1293 = vmatpush1.msra.mxu0 0.0
        %1294 = vmatprep.subr.mxu0 0.0
        %1295 = vmatpush1.msra.mxu0 0.0
        %1296 = vmatprep.subr.mxu0 0.0
        %1297 = vmatpush1.msra.mxu0 0.0
        %1298 = vmatprep.subr.mxu0 0.0
        %1299 = vmatpush1.msra.mxu0 0.0
        %1300 = vmatprep.subr.mxu0 0.0
        %1301 = vmatpush1.msra.mxu0 0.0
        %1302 = vmatprep.subr.mxu0 0.0
        %1303 = vmatpush1.msra.mxu0 0.0
        %1304 = vmatprep.subr.mxu0 0.0
        %1305 = vmatpush1.msra.mxu0 0.0
        %1306 = vmatprep.subr.mxu0 0.0
        %1307 = vmatpush1.msra.mxu0 0.0
        %1308 = vmatprep.subr.mxu0 0.0
        %1309 = vmatpush1.msra.mxu0 0.0
        %1310 = vmatprep.mubr.f32.mxu0 0.0
        %1311 = vmatmul.mubr.f32.gmra.mrb[0].mxu0 %v1240
        %v1312 = vpop.f32.mrb[0].mxu0
        %v1313 = vadd.f32 0.0, %v1312
        %v1314 = vpop.f32.mrb[0].mxu0
        %1315 = vdwg.mxu0
        %v1316 = vxor.u32 %v1313, 2147483648
        %v1317 = vmul.f32 %v1316, 1.442695
        %v1318 = vpow.pop %v1317
        %v1319 = vadd.f32 %v1318, 1.0
        %v1320 = vrcp.pop %v1319
        %v1321 = vmul.f32 1.0, %v1320
        %v1322 = vlaneseq
        %v1323 = vshrl.u32 %v1322, 7
        %v1324 = vsub.s32 0, %v1323
        %v1325 = vrot.slane %v1321, %v1324
        %v1326 = vmul.f32 %v1102, %v1325
        %v1327 = vmul.f32 %v1105, %v1325
        %v1328 = vmul.f32 %v1110, %v1325
        %v1329 = vmul.f32 %v1113, %v1325
        %v1330 = vmul.f32 %v1118, %v1325
        %v1331 = vmul.f32 %v1121, %v1325
        %v1332 = vmul.f32 %v1126, %v1325
        %v1333 = vmul.f32 %v1129, %v1325
        %v1334 = vadd.f32 %v1326, %v332
        %v1335 = vadd.f32 %v1327, %v333
        %v1336 = vadd.f32 %v1328, %v334
        %v1337 = vadd.f32 %v1329, %v335
        %v1338 = vadd.f32 %v1330, %v336
        %v1339 = vadd.f32 %v1331, %v337
        %v1340 = vadd.f32 %v1332, %v338
        %v1341 = vadd.f32 %v1333, %v339
        %v1342 = vmax.f32 %v1334, 0.0
        %v1343 = vmax.f32 %v1335, 0.0
        %v1344 = vmax.f32 %v1336, 0.0
        %v1345 = vmax.f32 %v1337, 0.0
        %v1346 = vmax.f32 %v1338, 0.0
        %v1347 = vmax.f32 %v1339, 0.0
        %v1348 = vmax.f32 %v1340, 0.0
        %v1349 = vmax.f32 %v1341, 0.0
        %1350 = vst.msk [vmem:[%s325] sm:$0xff] %vm383, %v1342
        %1351 = vst.msk [vmem:[%s325 + $0x8] sm:$0xff] %vm383, %v1343
        %1352 = vst.msk [vmem:[%s325 + $0x10] sm:$0xff] %vm383, %v1344
        %1353 = vst.msk [vmem:[%s325 + $0x18] sm:$0xff] %vm383, %v1345
        %1354 = vst.msk [vmem:[%s325 + $0x20] sm:$0xff] %vm383, %v1346
        %1355 = vst.msk [vmem:[%s325 + $0x28] sm:$0xff] %vm383, %v1347
        %1356 = vst.msk [vmem:[%s325 + $0x30] sm:$0xff] %vm383, %v1348
        %1357 = vst.msk [vmem:[%s325 + $0x38] sm:$0xff] %vm383, %v1349
        %s1358 = sand.u32 %s225, 1
        %s1359 = scalar_lea.sflag [#allocation4], %s1358
        %s1360 = sand.u32 %s225, 1
        %s1361 = smul.addr %s1360, 64
        %s1362 = scalar_lea.vmem [#allocation3], %s1361
        // Predicated region
        $region57: #{tpu_custom_call.1} parent=55 // pred_check
          %p1363 = pneg %p235
        $region58: #{tpu_custom_call.1} parent=55 // pred_check_branch
          %1365 = sbr.rel (%p1363) target = $region60
        $region59: #{tpu_custom_call.1} parent=55 // pred_region
          %s1367 = ssub.s32 1024, 1024
          %1368 = vsyncadd %s1359, %s1367
          %s1369 = smul.addr %s23, 8
          %s1370 = smul.addr %s1369, 128
          %s1371 = scalar_lea.hbm %s9, %s1370
          %s1372 = sshll.u32 %s1362, 4
          %s1373 = int_to_ptr.vmem [resolvable:$true] %s1372
          %1378 = dma.vmem_to_hbm [thread:$0]  %s1373, 1024, %s1371, %s1359, 128, 128, 8
        $region60: #{tpu_custom_call.1} parent=55 // pred_fallthru
          _
      $region56: #{tpu_custom_call.1} parent=5 // pred_fallthru
        _
      %p1379 = scmp.le.s32.totalorder 2, %s18
      // Predicated region
      $region61: #{tpu_custom_call.1} parent=5 // pred_check
        %p1380 = pneg %p1379
      $region62: #{tpu_custom_call.1} parent=5 // pred_check_branch
        %1382 = sbr.rel (%p1380) target = $region64
      $region63: #{tpu_custom_call.1} parent=5 // pred_region
        %s1383 = ssub.s32 %s18, 2
        // Predicated region
        $region65: #{tpu_custom_call.1} parent=63 // pred_check
          %p1384 = pneg %p241
        $region66: #{tpu_custom_call.1} parent=63 // pred_check_branch
          %1386 = sbr.rel (%p1384) target = $region68
        $region67: #{tpu_custom_call.1} parent=63 // pred_region
          %s1387 = sand.u32 %s226, 1
          %s1388 = scalar_lea.sflag [#allocation4], %s1387
          %s1389 = sand.u32 %s226, 1
          %s1390 = smul.addr %s1389, 64
          %s1391 = scalar_lea.vmem [#allocation3], %s1390
          %1392 = dma.done %s1388, 1024
        $region68: #{tpu_custom_call.1} parent=63 // pred_fallthru
          _
      $region64: #{tpu_custom_call.1} parent=5 // pred_fallthru
        _
    $region6: #{tpu_custom_call.1} parent=1 // loop_footer
      %s22 = sadd.s32 1, %s18
    $region7: #{tpu_custom_call.1} parent=1 // loop_footer_branch
      %17 = sbr.rel target = $region3
    $region8: #{tpu_custom_call.1} parent=1 // loop_exit
      _
    %1393 = vsyncpa [#allocation4], 1
    %s1394 = scalar_lea.sflag [#allocation4], 1
    %1395 = vsyncpa %s1394, 1

</llo_original>
